<compile_context>
chip_gen: v7x
topology: tpu7x:2x2x1
jax: 0.10.0
libtpu: 0.0.40
codegen_flags: <defaults>
</compile_context>

<pallas_src>
import functools

import jax
import jax.numpy as jnp
from jax import lax
from jax.experimental import pallas as pl
from jax.experimental.pallas import tpu as pltpu


_VMEM_LIMIT = 64 * 1024 * 1024


def _cout_tile(cout):
    # 256-wide output-channel tiles at the real width (768); full width at
    # small test shapes where Cout already fits a single tile.
    for ct in (256, 128):
        if cout % ct == 0:
            return ct
    return cout


def _im2col_3x3(x, H, W, Cin):
    """x: (H, W, Cin) -> (H*W, 9*Cin) bf16 patches for a pad=1, stride=1 3x3 conv.

    The zero halo is built with value-level concatenation in VMEM (no padded
    activation ever hits HBM), and the 9 taps are folded into one large-K
    matmul instead of 9 small-K ones.
    """
    x = x.astype(jnp.bfloat16)
    zr = jnp.zeros((1, W, Cin), jnp.bfloat16)
    xp = jnp.concatenate([zr, x, zr], axis=0)                 # (H+2, W, Cin)
    zc = jnp.zeros((H + 2, 1, Cin), jnp.bfloat16)
    xp = jnp.concatenate([zc, xp, zc], axis=1)                # (H+2, W+2, Cin)
    taps = [xp[ky:ky + H, kx:kx + W, :] for ky in range(3) for kx in range(3)]
    return jnp.concatenate(taps, axis=-1).reshape(H * W, 9 * Cin)


# ----------------------------------------------------------------------------
# Kernel 1: 3x3 conv (pad=1, stride=1, no bias) + folded BN + ReLU, bf16 out
# ----------------------------------------------------------------------------
def conv3x3_bn_relu_kernel(x_ref, w_ref, s_ref, b_ref, o_ref, *, H, W, Cin, relu):
    # x_ref: (1, H, W, Cin)   activation tile (bf16 or f32, cast to bf16 here)
    # w_ref: (9*Cin, Ct)      im2col-packed conv weights, bf16
    # s_ref, b_ref: (1, Ct)   folded BatchNorm scale / bias, f32
    # o_ref: (1, H, W, Ct)    bf16 output tile
    patches = _im2col_3x3(x_ref[0], H, W, Cin)                        # (HW, 9*Cin)
    acc = jnp.dot(patches, w_ref[...], preferred_element_type=jnp.float32)
    y = acc * s_ref[0] + b_ref[0]                                     # f32 epilogue
    if relu:
        y = jnp.maximum(y, 0.0)
    o_ref[0] = y.reshape(H, W, -1).astype(o_ref.dtype)


def conv3x3_bn_relu(x, w, scale, bias, *, relu=True):
    # x: (B, H, W, Cin) ; w: (3, 3, Cin, Cout) HWIO ; returns (B, H, W, Cout) bf16
    B, H, W, Cin = x.shape
    Cout = w.shape[-1]
    CT = _cout_tile(Cout)
    n_ct = Cout // CT
    w2 = w.reshape(9 * Cin, Cout).astype(jnp.bfloat16)   # (ky,kx,ci) packed order
    kern = functools.partial(conv3x3_bn_relu_kernel, H=H, W=W, Cin=Cin, relu=relu)
    return pl.pallas_call(
        kern,
        out_shape=jax.ShapeDtypeStruct((B, H, W, Cout), jnp.bfloat16),
        grid_spec=pltpu.PrefetchScalarGridSpec(
            num_scalar_prefetch=0,
            grid=(B, n_ct),
            in_specs=[
                pl.BlockSpec((1, H, W, Cin), lambda b, c: (b, 0, 0, 0)),
                pl.BlockSpec((9 * Cin, CT), lambda b, c: (0, c)),
                pl.BlockSpec((1, CT), lambda b, c: (0, c)),
                pl.BlockSpec((1, CT), lambda b, c: (0, c)),
            ],
            out_specs=pl.BlockSpec((1, H, W, CT), lambda b, c: (b, 0, 0, c)),
        ),
        compiler_params=pltpu.CompilerParams(
            dimension_semantics=("parallel", "parallel"),
            vmem_limit_bytes=_VMEM_LIMIT),
    )(x, w2, scale, bias)


# ----------------------------------------------------------------------------
# Kernel 2: final conv (no BN, no ReLU) fused with the L2-distance reduction
#   dist = sum_b sum_s || (sig?)(conv(x)[b,s,:]) - (sig?)(real[b,s,:]) ||_2
# The hallucination is never written to HBM.
# ----------------------------------------------------------------------------
def conv3x3_dist_kernel(x_ref, w_ref, real_ref, o_ref, sq_acc, *,
                        H, W, Cin, apply_sigmoid):
    b = pl.program_id(0)
    c = pl.program_id(1)

    @pl.when(jnp.logical_and(b == 0, c == 0))
    def _():
        o_ref[...] = jnp.zeros_like(o_ref)

    @pl.when(c == 0)
    def _():
        sq_acc[...] = jnp.zeros_like(sq_acc)

    patches = _im2col_3x3(x_ref[0], H, W, Cin)                        # (HW, 9*Cin)
    hall = jnp.dot(patches, w_ref[...], preferred_element_type=jnp.float32)
    real = real_ref[0].astype(jnp.float32).reshape(H * W, -1)
    if apply_sigmoid:
        hall = jax.nn.sigmoid(hall)
        real = jax.nn.sigmoid(real)
    d = hall - real
    # Per-row squared-norm partial sum over this channel tile, accumulated in a
    # lane-dense f32 scratch across Cout tiles.
    sq = jnp.sum(d * d, axis=-1, keepdims=True)                       # (HW, 1)
    sq_acc[...] += sq.reshape(sq_acc.shape)

    @pl.when(c == pl.num_programs(1) - 1)
    def _():
        o_ref[...] += jnp.sum(jnp.sqrt(sq_acc[...]), keepdims=True)   # (1, 1)


def conv3x3_l2_distance(x, w, real_nhwc, *, apply_sigmoid):
    # x: (B, H, W, Cin) bf16 (layer-2 activations) ; w: (3,3,Cin,Cout) HWIO
    # real_nhwc: (B, H, W, Cout) f32 real feature to compare against.
    B, H, W, Cin = x.shape
    Cout = w.shape[-1]
    CT = _cout_tile(Cout)
    n_ct = Cout // CT
    HW = H * W
    LN = 128 if HW % 128 == 0 else 1       # lane-dense scratch when possible
    w2 = w.reshape(9 * Cin, Cout).astype(jnp.bfloat16)
    kern = functools.partial(conv3x3_dist_kernel, H=H, W=W, Cin=Cin,
                             apply_sigmoid=apply_sigmoid)
    out = pl.pallas_call(
        kern,
        out_shape=jax.ShapeDtypeStruct((1, 1), jnp.float32),
        grid_spec=pltpu.PrefetchScalarGridSpec(
            num_scalar_prefetch=0,
            grid=(B, n_ct),
            in_specs=[
                pl.BlockSpec((1, H, W, Cin), lambda b, c: (b, 0, 0, 0)),
                pl.BlockSpec((9 * Cin, CT), lambda b, c: (0, c)),
                pl.BlockSpec((1, H, W, CT), lambda b, c: (b, 0, 0, c)),
            ],
            out_specs=pl.BlockSpec((1, 1), lambda b, c: (0, 0)),
            scratch_shapes=[pltpu.VMEM((HW // LN, LN), jnp.float32)],
        ),
        compiler_params=pltpu.CompilerParams(
            dimension_semantics=("arbitrary", "arbitrary"),
            vmem_limit_bytes=_VMEM_LIMIT),
    )(x, w2, real_nhwc)
    return out[0, 0]


# ----------------------------------------------------------------------------
# Model glue (out_type == 'train' path of hallucination_generation + forward)
# ----------------------------------------------------------------------------
def conv_branch_prefix(tokens, branch, H, W):
    # First 3 conv+BN+ReLU layers; returns bf16 NHWC activations for the fused
    # final conv + distance kernel.
    B, HW, Cin = tokens.shape
    y = tokens.reshape(B, H, W, Cin)               # feature_reshape (NHWC layout)
    for i in range(3):
        y = conv3x3_bn_relu(y, branch["w"][i], branch["scale"][i],
                            branch["bias"][i], relu=True)
    return y


def hallucination_forward(xyz_feature, rgb_feature, params, *, sigmoid, H, W):
    B, HW, D = xyz_feature.shape
    xyz_nhwc = xyz_feature.reshape(B, H, W, D)
    rgb_nhwc = rgb_feature.reshape(B, H, W, D)

    # xyz hallucination = rgb_conv(rgb_feature), compared against real xyz.
    # (Original module asserts hallucination shape (3136, 768); here the
    # hallucination stays fused inside the distance kernel and never hits HBM.)
    y = conv_branch_prefix(rgb_feature, params["rgb_conv"], H, W)
    d_xyz = conv3x3_l2_distance(y, params["rgb_conv"]["w"][3], xyz_nhwc,
                                apply_sigmoid=sigmoid) / B

    # rgb hallucination = xyz_conv(xyz_feature), compared against real rgb.
    y = conv_branch_prefix(xyz_feature, params["xyz_conv"], H, W)
    d_rgb = conv3x3_l2_distance(y, params["xyz_conv"]["w"][3], rgb_nhwc,
                                apply_sigmoid=sigmoid) / B
    return d_xyz, d_rgb


# ----------------------------------------------------------------------------
# Deterministic parameter init (shapes follow the nn.Module __init__)
# ----------------------------------------------------------------------------
def init_branch(key, cin, cout):
    ws, scales, biases = [], [], []
    for i in range(4):
        key, kw, kg, kb, km, kv = jax.random.split(key, 6)
        ci = cin if i == 0 else cout
        w = jax.random.normal(kw, (3, 3, ci, cout), jnp.float32) * jnp.sqrt(
            2.0 / (9.0 * ci))
        ws.append(w)
        if i < 3:   # conv layers 0..2 are followed by BN (+ReLU); last conv is not
            gamma = jax.random.uniform(kg, (cout,), minval=0.5, maxval=1.5)
            beta = 0.1 * jax.random.normal(kb, (cout,))
            mean = 0.1 * jax.random.normal(km, (cout,))
            var = jax.random.uniform(kv, (cout,), minval=0.5, maxval=1.5)
            scale = gamma / jnp.sqrt(var + 1e-5)
            bias = beta - mean * scale
        else:
            scale = jnp.ones((cout,))
            bias = jnp.zeros((cout,))
        scales.append(scale.reshape(1, cout).astype(jnp.float32))
        biases.append(bias.reshape(1, cout).astype(jnp.float32))
    return {"w": ws, "scale": scales, "bias": biases}


def init_params(key, dim):
    k1, k2 = jax.random.split(key)
    return {
        "xyz_conv": init_branch(k1, dim, dim),
        "rgb_conv": init_branch(k2, dim, dim),
    }


# ----------------------------------------------------------------------------
# Pure-JAX reference (same bf16-MXU / f32-accumulate numerics as the kernels)
# ----------------------------------------------------------------------------
def ref_forward(xyz, rgb, params, *, sigmoid, H, W):
    def branch(tokens, p):
        B, HW, Cin = tokens.shape
        y = tokens.reshape(B, H, W, Cin).astype(jnp.bfloat16)
        for i in range(4):
            y = lax.conv_general_dilated(
                y, p["w"][i].astype(jnp.bfloat16), window_strides=(1, 1),
                padding="SAME", dimension_numbers=("NHWC", "HWIO", "NHWC"),
                preferred_element_type=jnp.float32)
            y = y * p["scale"][i][0] + p["bias"][i][0]
            if i < 3:
                y = jnp.maximum(y, 0.0).astype(jnp.bfloat16)
        return y.reshape(B, HW, -1)

    xyz_h = branch(rgb, params["rgb_conv"])
    rgb_h = branch(xyz, params["xyz_conv"])

    def dist(h, x):
        if sigmoid:
            h = jax.nn.sigmoid(h)
            x = jax.nn.sigmoid(x)
        n = jnp.linalg.norm(h - x, axis=2)
        return jnp.sum(n) / n.shape[0]

    return dist(xyz_h, xyz), dist(rgb_h, rgb)


if __name__ == "__main__":
    # Small shapes consistent with the module structure:
    # seq = H*W tokens, hidden dim D (original: 56*56=3136 tokens, 768 dim).
    B, H, W, D = 2, 16, 16, 32
    HW = H * W

    key = jax.random.PRNGKey(0)
    k_xyz, k_rgb, k_params = jax.random.split(key, 3)
    xyz_feature = jax.random.normal(k_xyz, (B, HW, D), jnp.float32)
    rgb_feature = jax.random.normal(k_rgb, (B, HW, D), jnp.float32)
    params = init_params(k_params, D)

    d_xyz, d_rgb = hallucination_forward(
        xyz_feature, rgb_feature, params, sigmoid=True, H=H, W=W)
    jax.block_until_ready((d_xyz, d_rgb))

    r_xyz, r_rgb = ref_forward(
        xyz_feature, rgb_feature, params, sigmoid=True, H=H, W=W)
    assert jnp.allclose(d_xyz, r_xyz, rtol=5e-3, atol=5e-3), (d_xyz, r_xyz)
    assert jnp.allclose(d_rgb, r_rgb, rtol=5e-3, atol=5e-3), (d_rgb, r_rgb)

    print("KERNEL_OK")
</pallas_src>

<mosaic_0001>
module attributes {stable_mosaic.version = 11 : i64} {
  func.func @conv3x3_bn_relu_kernel(%arg0: i32, %arg1: i32, %arg2: memref<1x16x16x32xf32, #tpu.memory_space<vmem>>, %arg3: memref<288x32xbf16, #tpu.memory_space<vmem>>, %arg4: memref<1x32xf32, #tpu.memory_space<vmem>>, %arg5: memref<1x32xf32, #tpu.memory_space<vmem>>, %arg6: memref<1x16x16x32xbf16, #tpu.memory_space<vmem>>) attributes {dimension_semantics = [#tpu.dimension_semantics<parallel>, #tpu.dimension_semantics<parallel>], iteration_bounds = array<i64: 2, 1>, scalar_prefetch = 0 : i64, scratch_operands = 0 : i64, tpu.core_type = #tpu.core_type<tc>, window_params = [{transform_indices = @transform_0, window_bounds = array<i64: 1, 16, 16, 32>}, {transform_indices = @transform_1, window_bounds = array<i64: 288, 32>}, {transform_indices = @transform_2, window_bounds = array<i64: 1, 32>}, {transform_indices = @transform_3, window_bounds = array<i64: 1, 32>}, {transform_indices = @transform_4, window_bounds = array<i64: 1, 16, 16, 32>}]} {
    %c0 = arith.constant 0 : index
    %c0_0 = arith.constant 0 : index
    %c0_1 = arith.constant 0 : index
    %c0_2 = arith.constant 0 : index
    %0 = vector.load %arg2[%c0, %c0_0, %c0_1, %c0_2] : memref<1x16x16x32xf32, #tpu.memory_space<vmem>>, vector<1x16x16x32xf32>
    %1 = vector.shape_cast %0 : vector<1x16x16x32xf32> to vector<16x16x32xf32>
    %2 = arith.truncf %1 : vector<16x16x32xf32> to vector<16x16x32xbf16>
    %cst = arith.constant 0.000000e+00 : bf16
    %3 = vector.broadcast %cst : bf16 to vector<1x16x32xbf16>
    %4 = tpu.concatenate %3, %2, %3 in 0 : vector<1x16x32xbf16>, vector<16x16x32xbf16>, vector<1x16x32xbf16> -> vector<18x16x32xbf16>
    %cst_3 = arith.constant 0.000000e+00 : bf16
    %5 = vector.broadcast %cst_3 : bf16 to vector<18x1x32xbf16>
    %6 = tpu.concatenate %5, %4, %5 in 1 : vector<18x1x32xbf16>, vector<18x16x32xbf16>, vector<18x1x32xbf16> -> vector<18x18x32xbf16>
    %7 = vector.extract_strided_slice %6 {offsets = [0, 0, 0], sizes = [16, 16, 32], strides = [1, 1, 1]} : vector<18x18x32xbf16> to vector<16x16x32xbf16>
    %8 = vector.extract_strided_slice %6 {offsets = [0, 1, 0], sizes = [16, 16, 32], strides = [1, 1, 1]} : vector<18x18x32xbf16> to vector<16x16x32xbf16>
    %9 = vector.extract_strided_slice %6 {offsets = [0, 2, 0], sizes = [16, 16, 32], strides = [1, 1, 1]} : vector<18x18x32xbf16> to vector<16x16x32xbf16>
    %10 = vector.extract_strided_slice %6 {offsets = [1, 0, 0], sizes = [16, 16, 32], strides = [1, 1, 1]} : vector<18x18x32xbf16> to vector<16x16x32xbf16>
    %11 = vector.extract_strided_slice %6 {offsets = [1, 1, 0], sizes = [16, 16, 32], strides = [1, 1, 1]} : vector<18x18x32xbf16> to vector<16x16x32xbf16>
    %12 = vector.extract_strided_slice %6 {offsets = [1, 2, 0], sizes = [16, 16, 32], strides = [1, 1, 1]} : vector<18x18x32xbf16> to vector<16x16x32xbf16>
    %13 = vector.extract_strided_slice %6 {offsets = [2, 0, 0], sizes = [16, 16, 32], strides = [1, 1, 1]} : vector<18x18x32xbf16> to vector<16x16x32xbf16>
    %14 = vector.extract_strided_slice %6 {offsets = [2, 1, 0], sizes = [16, 16, 32], strides = [1, 1, 1]} : vector<18x18x32xbf16> to vector<16x16x32xbf16>
    %15 = vector.extract_strided_slice %6 {offsets = [2, 2, 0], sizes = [16, 16, 32], strides = [1, 1, 1]} : vector<18x18x32xbf16> to vector<16x16x32xbf16>
    %16 = tpu.concatenate %7, %8, %9, %10, %11, %12, %13, %14, %15 in 2 : vector<16x16x32xbf16>, vector<16x16x32xbf16>, vector<16x16x32xbf16>, vector<16x16x32xbf16>, vector<16x16x32xbf16>, vector<16x16x32xbf16>, vector<16x16x32xbf16>, vector<16x16x32xbf16>, vector<16x16x32xbf16> -> vector<16x16x288xbf16>
    %17 = vector.shape_cast %16 : vector<16x16x288xbf16> to vector<256x288xbf16>
    %c0_4 = arith.constant 0 : index
    %c0_5 = arith.constant 0 : index
    %18 = vector.load %arg3[%c0_4, %c0_5] : memref<288x32xbf16, #tpu.memory_space<vmem>>, vector<288x32xbf16>
    %cst_6 = arith.constant dense<0.000000e+00> : vector<256x32xf32>
    %19 = tpu.matmul %17, %18, %cst_6 {dimension_numbers = #tpu.dot_dimension_numbers<[1], [0], [0], [1], [0, 0, 1, 1], [], []>} : vector<256x288xbf16>, vector<288x32xbf16>, vector<256x32xf32> -> vector<256x32xf32>
    %c0_7 = arith.constant 0 : index
    %c0_8 = arith.constant 0 : index
    %20 = vector.load %arg4[%c0_7, %c0_8] : memref<1x32xf32, #tpu.memory_space<vmem>>, vector<1x32xf32>
    %21 = vector.shape_cast %20 : vector<1x32xf32> to vector<32xf32>
    %22 = vector.shape_cast %21 : vector<32xf32> to vector<1x32xf32>
    %23 = vector.broadcast %22 : vector<1x32xf32> to vector<256x32xf32>
    %24 = arith.mulf %19, %23 : vector<256x32xf32>
    %c0_9 = arith.constant 0 : index
    %c0_10 = arith.constant 0 : index
    %25 = vector.load %arg5[%c0_9, %c0_10] : memref<1x32xf32, #tpu.memory_space<vmem>>, vector<1x32xf32>
    %26 = vector.shape_cast %25 : vector<1x32xf32> to vector<32xf32>
    %27 = vector.shape_cast %26 : vector<32xf32> to vector<1x32xf32>
    %28 = vector.broadcast %27 : vector<1x32xf32> to vector<256x32xf32>
    %29 = arith.addf %24, %28 : vector<256x32xf32>
    %cst_11 = arith.constant 0.000000e+00 : f32
    %30 = vector.broadcast %cst_11 : f32 to vector<256x32xf32>
    %31 = arith.maximumf %29, %30 : vector<256x32xf32>
    %32 = vector.shape_cast %31 : vector<256x32xf32> to vector<16x16x32xf32>
    %33 = arith.truncf %32 : vector<16x16x32xf32> to vector<16x16x32xbf16>
    %c0_12 = arith.constant 0 : index
    %c0_13 = arith.constant 0 : index
    %c0_14 = arith.constant 0 : index
    %c0_15 = arith.constant 0 : index
    %34 = vector.load %arg6[%c0_12, %c0_13, %c0_14, %c0_15] : memref<1x16x16x32xbf16, #tpu.memory_space<vmem>>, vector<1x16x16x32xbf16>
    %35 = vector.shape_cast %34 : vector<1x16x16x32xbf16> to vector<16x16x32xbf16>
    %36 = vector.shape_cast %33 : vector<16x16x32xbf16> to vector<1x16x16x32xbf16>
    tpu.vector_store %arg6[%c0_12, %c0_13, %c0_14, %c0_15], %36 {strides = array<i32>} : memref<1x16x16x32xbf16, #tpu.memory_space<vmem>>, vector<1x16x16x32xbf16>,
    return
  }
  func.func @transform_0(%arg0: i32, %arg1: i32) -> (i32, i32, i32, i32) {
    %c0_i32 = arith.constant 0 : i32
    %c0_i32_0 = arith.constant 0 : i32
    %c0_i32_1 = arith.constant 0 : i32
    %c0_i32_2 = arith.constant 0 : i32
    return %arg0, %c0_i32, %c0_i32_0, %c0_i32_1 : i32, i32, i32, i32
  }
  func.func @transform_1(%arg0: i32, %arg1: i32) -> (i32, i32) {
    %c0_i32 = arith.constant 0 : i32
    %c0_i32_0 = arith.constant 0 : i32
    return %c0_i32, %arg1 : i32, i32
  }
  func.func @transform_2(%arg0: i32, %arg1: i32) -> (i32, i32) {
    %c0_i32 = arith.constant 0 : i32
    %c0_i32_0 = arith.constant 0 : i32
    return %c0_i32, %arg1 : i32, i32
  }
  func.func @transform_3(%arg0: i32, %arg1: i32) -> (i32, i32) {
    %c0_i32 = arith.constant 0 : i32
    %c0_i32_0 = arith.constant 0 : i32
    return %c0_i32, %arg1 : i32, i32
  }
  func.func @transform_4(%arg0: i32, %arg1: i32) -> (i32, i32, i32, i32) {
    %c0_i32 = arith.constant 0 : i32
    %c0_i32_0 = arith.constant 0 : i32
    %c0_i32_1 = arith.constant 0 : i32
    return %arg0, %c0_i32, %c0_i32_0, %arg1 : i32, i32, i32, i32
  }
}

</mosaic_0001>

<llo_original>
// kernel: tpu_custom_call.1
$region0: #{tpu_custom_call.1}
  #allocation0 [shape = 'u32[]', space=smem, size = 0x4, offset = 0x4, fixed_abs, tag = 'smem constant byte address 0x4 - core index']
  #allocation1 [shape = 'u32[144,128]{1,0:T(1,128)}', space=vmem, size = 0x12000, scoped, tag = 'internal scratch']
  %s0 = inlined_call_operand.hbm [shape: f32[2,16,16,32], index: 0, kind: input, shape index: {}]
  %s1 = inlined_call_operand.hbm [shape: bf16[288,32], index: 1, kind: input, shape index: {}]
  %s2 = inlined_call_operand.hbm [shape: f32[1,32], index: 2, kind: input, shape index: {}]
  %s3 = inlined_call_operand.hbm [shape: f32[1,32], index: 3, kind: input, shape index: {}]
  %s4 = inlined_call_operand.hbm [shape: bf16[2,16,16,32], index: 4, kind: output, shape index: {}]
  %s5 = sld [smem:[#allocation0]]
  $region65: #{tpu_custom_call.1} parent=0
    _
  %s7 = ssub.s32 1, %s5
  %s8 = scalar_select 0, %s7, %s5
  $region1: #{tpu_custom_call.1} parent=0
    #allocation2 [shape = 'u8[262144]{0}', space=vmem, size = 0x40000, scoped, tag = 'input window, operand 0']
    #allocation3 [shape = 's32[2]{0}', space=sflag, size = 0x8, scoped, tag = 'scoped memory for tpu_custom_call.1']
    #allocation4 [shape = 's32[2]{0}', space=sflag, size = 0x8, scoped, tag = 'scoped memory for tpu_custom_call.1']
    #allocation5 [shape = 'u8[73728]{0}', space=vmem, size = 0x12000, scoped, tag = 'input window, operand 1, single buffered']
    #allocation6 [shape = 's32[1]{0}', space=sflag, size = 0x4, scoped, tag = 'scoped memory for tpu_custom_call.1']
    #allocation7 [shape = 'u8[512]{0}', space=vmem, size = 0x400, scoped, tag = 'input window, operand 2, single buffered']
    #allocation8 [shape = 'u8[512]{0}', space=vmem, size = 0x400, scoped, tag = 'input window, operand 3, single buffered']
    #allocation9 [shape = 's32[1]{0}', space=sflag, size = 0x4, scoped, tag = 'scoped memory for tpu_custom_call.1']
    #allocation10 [shape = 'u8[131072]{0}', space=vmem, size = 0x20000, scoped, tag = 'output window, operand 0']
    %9 = vsyncpa [#allocation3], 0
    %s10 = scalar_lea.sflag [#allocation3], 1
    %11 = vsyncpa %s10, 0
    %12 = vsyncpa [#allocation6], 0
    %13 = vsyncpa [#allocation9], 0
    %14 = vsyncpa [#allocation4], 0
    %s15 = scalar_lea.sflag [#allocation4], 1
    %16 = vsyncpa %s15, 0
    loop: start=0, step=1, limit=4
    $region2: #{tpu_custom_call.1} parent=1 // loop_pre_header
      _
    $region3: #{tpu_custom_call.1} parent=1 // loop_header
      %s18 = sphi 0, %s22
      %p19 = scmp.ge.s32.totalorder %s18, 4
      %s25 = sphi 0, %s37
      %s26 = sphi 0, %s33
      %s27 = sphi 0, %s25
      %s28 = sphi 0, %s26
      %s29 = sphi 0, %s27
      %s30 = sphi 0, %s28
      %s40 = sphi 0, %s42
      %s43 = sphi 0, %s40
      %s44 = sphi 0, %s43
      %s60 = sphi 0, %s44
      %s66 = sphi 0, %s68
      %s69 = sphi 0, %s66
      %s70 = sphi 0, %s69
      %s86 = sphi 0, %s70
      %s92 = sphi 0, %s94
      %s95 = sphi 0, %s92
      %s96 = sphi 0, %s95
      %s112 = sphi 0, %s96
      %s118 = sphi 0, %s120
      %s121 = sphi 0, %s118
      %s122 = sphi 0, %s121
      %s138 = sphi 0, %s122
      %s146 = sphi 0, %s148
      %s149 = sphi 0, %s146
      %s150 = sphi 0, %s149
      %s166 = sphi 0, %s150
    $region4: #{tpu_custom_call.1} parent=1 // loop_header_branch
      %21 = sbr.rel (%p19) target = $region8
    $region5: #{tpu_custom_call.1} parent=1 // loop_body
      %s23 = ssub.s32 %s18, 1
      %s24 = ssub.s32 %s18, 2
      %s31 = sadd.s32 1, %s26
      %p32 = scmp.ge.s32.totalorder %s31, 1
      %s33 = scalar_select %p32, 0, %s31
      %s34 = sadd.s32 1, %s25
      %s35 = scalar_select %p32, %s34, %s25
      %p36 = scmp.ge.s32.totalorder %s35, 2
      %s37 = scalar_select %p36, 0, %s35
      %s38 = ssub.s32 %s25, %s37
      %p39 = scmp.eq.s32.totalorder %s38, 0
      %s41 = sadd.s32 %s40, 1
      %s42 = scalar_select %p39, %s40, %s41
      %p45 = pneg %p39
      %p46 = scmp.eq.s32.totalorder %s18, 1
      %p47 = por %p45, %p46
      %p48 = scmp.ne.s32.totalorder %s40, %s43
      %p49 = scmp.eq.s32.totalorder %s18, 0
      %p50 = por %p48, %p49
      %p51 = scmp.ne.s32.totalorder %s40, %s43
      %p52 = scmp.eq.s32.totalorder %s23, 1
      %p53 = por %p51, %p52
      %p54 = scmp.ne.s32.totalorder %s43, %s44
      %p55 = scmp.eq.s32.totalorder %s23, 0
      %p56 = por %p54, %p55
      %p57 = scmp.ne.s32.totalorder %s43, %s44
      %p58 = scmp.eq.s32.totalorder %s24, 1
      %p59 = por %p57, %p58
      %p61 = scmp.ne.s32.totalorder %s44, %s60
      %p62 = scmp.eq.s32.totalorder %s24, 0
      %p63 = por %p61, %p62
      %s64 = ssub.s32 %s26, %s33
      %p65 = scmp.eq.s32.totalorder %s64, 0
      %s67 = sadd.s32 %s66, 1
      %s68 = scalar_select %p65, %s66, %s67
      %p71 = pneg %p65
      %p72 = scmp.eq.s32.totalorder %s18, 1
      %p73 = por %p71, %p72
      %p74 = scmp.ne.s32.totalorder %s66, %s69
      %p75 = scmp.eq.s32.totalorder %s18, 0
      %p76 = por %p74, %p75
      %p77 = scmp.ne.s32.totalorder %s66, %s69
      %p78 = scmp.eq.s32.totalorder %s23, 1
      %p79 = por %p77, %p78
      %p80 = scmp.ne.s32.totalorder %s69, %s70
      %p81 = scmp.eq.s32.totalorder %s23, 0
      %p82 = por %p80, %p81
      %p83 = scmp.ne.s32.totalorder %s69, %s70
      %p84 = scmp.eq.s32.totalorder %s24, 1
      %p85 = por %p83, %p84
      %p87 = scmp.ne.s32.totalorder %s70, %s86
      %p88 = scmp.eq.s32.totalorder %s24, 0
      %p89 = por %p87, %p88
      %s90 = ssub.s32 %s26, %s33
      %p91 = scmp.eq.s32.totalorder %s90, 0
      %s93 = sadd.s32 %s92, 1
      %s94 = scalar_select %p91, %s92, %s93
      %p97 = pneg %p91
      %p98 = scmp.eq.s32.totalorder %s18, 1
      %p99 = por %p97, %p98
      %p100 = scmp.ne.s32.totalorder %s92, %s95
      %p101 = scmp.eq.s32.totalorder %s18, 0
      %p102 = por %p100, %p101
      %p103 = scmp.ne.s32.totalorder %s92, %s95
      %p104 = scmp.eq.s32.totalorder %s23, 1
      %p105 = por %p103, %p104
      %p106 = scmp.ne.s32.totalorder %s95, %s96
      %p107 = scmp.eq.s32.totalorder %s23, 0
      %p108 = por %p106, %p107
      %p109 = scmp.ne.s32.totalorder %s95, %s96
      %p110 = scmp.eq.s32.totalorder %s24, 1
      %p111 = por %p109, %p110
      %p113 = scmp.ne.s32.totalorder %s96, %s112
      %p114 = scmp.eq.s32.totalorder %s24, 0
      %p115 = por %p113, %p114
      %s116 = ssub.s32 %s26, %s33
      %p117 = scmp.eq.s32.totalorder %s116, 0
      %s119 = sadd.s32 %s118, 1
      %s120 = scalar_select %p117, %s118, %s119
      %p123 = pneg %p117
      %p124 = scmp.eq.s32.totalorder %s18, 1
      %p125 = por %p123, %p124
      %p126 = scmp.ne.s32.totalorder %s118, %s121
      %p127 = scmp.eq.s32.totalorder %s18, 0
      %p128 = por %p126, %p127
      %p129 = scmp.ne.s32.totalorder %s118, %s121
      %p130 = scmp.eq.s32.totalorder %s23, 1
      %p131 = por %p129, %p130
      %p132 = scmp.ne.s32.totalorder %s121, %s122
      %p133 = scmp.eq.s32.totalorder %s23, 0
      %p134 = por %p132, %p133
      %p135 = scmp.ne.s32.totalorder %s121, %s122
      %p136 = scmp.eq.s32.totalorder %s24, 1
      %p137 = por %p135, %p136
      %p139 = scmp.ne.s32.totalorder %s122, %s138
      %p140 = scmp.eq.s32.totalorder %s24, 0
      %p141 = por %p139, %p140
      %s142 = ssub.s32 %s25, %s37
      %s143 = ssub.s32 %s26, %s33
      %s144 = sor.u32 %s142, %s143
      %p145 = scmp.eq.s32.totalorder %s144, 0
      %s147 = sadd.s32 %s146, 1
      %s148 = scalar_select %p145, %s146, %s147
      %p151 = pneg %p145
      %p152 = scmp.eq.s32.totalorder %s18, 1
      %p153 = por %p151, %p152
      %p154 = scmp.ne.s32.totalorder %s146, %s149
      %p155 = scmp.eq.s32.totalorder %s18, 0
      %p156 = por %p154, %p155
      %p157 = scmp.ne.s32.totalorder %s146, %s149
      %p158 = scmp.eq.s32.totalorder %s23, 1
      %p159 = por %p157, %p158
      %p160 = scmp.ne.s32.totalorder %s149, %s150
      %p161 = scmp.eq.s32.totalorder %s23, 0
      %p162 = por %p160, %p161
      %p163 = scmp.ne.s32.totalorder %s149, %s150
      %p164 = scmp.eq.s32.totalorder %s24, 1
      %p165 = por %p163, %p164
      %p167 = scmp.ne.s32.totalorder %s150, %s166
      %p168 = scmp.eq.s32.totalorder %s24, 0
      %p169 = por %p167, %p168
      %p170 = scmp.le.s32.totalorder 1, %s18
      %p171 = scmp.lt.s32.totalorder %s18, 3
      %p172 = pnand %p170, %p171
      %p173 = pneg %p172
      // Predicated region
      $region9: #{tpu_custom_call.1} parent=5 // pred_check
        _
      $region10: #{tpu_custom_call.1} parent=5 // pred_check_branch
        %175 = sbr.rel (%p172) target = $region12
      $region11: #{tpu_custom_call.1} parent=5 // pred_region
        %s176 = ssub.s32 %s18, 1
        // Predicated region
        $region13: #{tpu_custom_call.1} parent=11 // pred_check
          %p177 = pneg %p82
        $region14: #{tpu_custom_call.1} parent=11 // pred_check_branch
          %179 = sbr.rel (%p177) target = $region16
        $region15: #{tpu_custom_call.1} parent=11 // pred_region
          %s181 = ssub.s32 2304, 2304
          %182 = vsyncadd [#allocation6], %s181
          %s183 = smul.addr %s28, 64
          %s184 = scalar_lea.hbm %s1, %s183
          %s185 = sshll.u32 [#allocation5], 4
          %s186 = int_to_ptr.vmem [resolvable:$true] %s185
          %191 = dma.hbm_to_vmem [thread:$0]  %s184, 2304, %s186, [#allocation6], 64, 64, 4
        $region16: #{tpu_custom_call.1} parent=11 // pred_fallthru
          _
        // Predicated region
        $region17: #{tpu_custom_call.1} parent=11 // pred_check
          %p192 = pneg %p108
        $region18: #{tpu_custom_call.1} parent=11 // pred_check_branch
          %194 = sbr.rel (%p192) target = $region20
        $region19: #{tpu_custom_call.1} parent=11 // pred_region
          %s196 = ssub.s32 16, 16
          %197 = vsyncadd [#allocation6], %s196
          %s198 = smul.addr %s28, 16
          %s199 = scalar_lea.hbm %s2, %s198
          %s201 = sshll.u32 [#allocation7], 4
          %s202 = int_to_ptr.vmem [resolvable:$true] %s201
          %204 = dma.hbm_to_vmem [thread:$0]  %s199, 16, %s202, [#allocation6]
        $region20: #{tpu_custom_call.1} parent=11 // pred_fallthru
          _
        // Predicated region
        $region21: #{tpu_custom_call.1} parent=11 // pred_check
          %p205 = pneg %p134
        $region22: #{tpu_custom_call.1} parent=11 // pred_check_branch
          %207 = sbr.rel (%p205) target = $region24
        $region23: #{tpu_custom_call.1} parent=11 // pred_region
          %s209 = ssub.s32 16, 16
          %210 = vsyncadd [#allocation9], %s209
          %s211 = smul.addr %s28, 16
          %s212 = scalar_lea.hbm %s3, %s211
          %s214 = sshll.u32 [#allocation8], 4
          %s215 = int_to_ptr.vmem [resolvable:$true] %s214
          %217 = dma.hbm_to_vmem [thread:$0]  %s212, 16, %s215, [#allocation9]
        $region24: #{tpu_custom_call.1} parent=11 // pred_fallthru
          _
      $region12: #{tpu_custom_call.1} parent=5 // pred_fallthru
        _
      %p218 = scmp.lt.s32.totalorder %s18, 2
      // Predicated region
      $region25: #{tpu_custom_call.1} parent=5 // pred_check
        %p219 = pneg %p218
      $region26: #{tpu_custom_call.1} parent=5 // pred_check_branch
        %221 = sbr.rel (%p219) target = $region28
      $region27: #{tpu_custom_call.1} parent=5 // pred_region
        // Predicated region
        $region29: #{tpu_custom_call.1} parent=27 // pred_check
          %p222 = pneg %p50
        $region30: #{tpu_custom_call.1} parent=27 // pred_check_branch
          %224 = sbr.rel (%p222) target = $region32
        $region31: #{tpu_custom_call.1} parent=27 // pred_region
          %s225 = sand.u32 %s40, 1
          %s226 = scalar_lea.sflag [#allocation3], %s225
          %s227 = sand.u32 %s40, 1
          %s228 = smul.addr %s227, 256
          %s229 = scalar_lea.vmem [#allocation2], %s228
          %s231 = ssub.s32 4096, 4096
          %232 = vsyncadd %s226, %s231
          %s233 = smul.addr %s25, 32
          %s234 = smul.addr %s233, 128
          %s235 = scalar_lea.hbm %s0, %s234
          %s236 = sshll.u32 %s229, 4
          %s237 = int_to_ptr.vmem [resolvable:$true] %s236
          %242 = dma.hbm_to_vmem [thread:$0]  %s235, 4096, %s237, %s226, 128, 128, 8
        $region32: #{tpu_custom_call.1} parent=27 // pred_fallthru
          _
      $region28: #{tpu_custom_call.1} parent=5 // pred_fallthru
        _
      %p243 = scmp.le.s32.totalorder 1, %s18
      %p244 = scmp.lt.s32.totalorder %s18, 3
      %p245 = pnand %p243, %p244
      %p246 = pneg %p245
      // Predicated region
      $region33: #{tpu_custom_call.1} parent=5 // pred_check
        _
      $region34: #{tpu_custom_call.1} parent=5 // pred_check_branch
        %248 = sbr.rel (%p245) target = $region36
      $region35: #{tpu_custom_call.1} parent=5 // pred_region
        %s249 = ssub.s32 %s18, 1
        %s250 = sand.u32 %s43, 1
        %s251 = scalar_lea.sflag [#allocation3], %s250
        %s252 = sand.u32 %s43, 1
        %s253 = smul.addr %s252, 256
        %s254 = scalar_lea.vmem [#allocation2], %s253
        // Predicated region
        $region37: #{tpu_custom_call.1} parent=35 // pred_check
          %p255 = pneg %p56
        $region38: #{tpu_custom_call.1} parent=35 // pred_check_branch
          %257 = sbr.rel (%p255) target = $region40
        $region39: #{tpu_custom_call.1} parent=35 // pred_region
          %258 = dma.done %s251, 4096
        $region40: #{tpu_custom_call.1} parent=35 // pred_fallthru
          _
        // Predicated region
        $region41: #{tpu_custom_call.1} parent=35 // pred_check
          %p259 = pneg %p82
        $region42: #{tpu_custom_call.1} parent=35 // pred_check_branch
          %261 = sbr.rel (%p259) target = $region44
        $region43: #{tpu_custom_call.1} parent=35 // pred_region
          %262 = dma.done [#allocation6], 2304
        $region44: #{tpu_custom_call.1} parent=35 // pred_fallthru
          _
        // Predicated region
        $region45: #{tpu_custom_call.1} parent=35 // pred_check
          %p263 = pneg %p108
        $region46: #{tpu_custom_call.1} parent=35 // pred_check_branch
          %265 = sbr.rel (%p263) target = $region48
        $region47: #{tpu_custom_call.1} parent=35 // pred_region
          %266 = dma.done [#allocation6], 16
        $region48: #{tpu_custom_call.1} parent=35 // pred_fallthru
          _
        // Predicated region
        $region49: #{tpu_custom_call.1} parent=35 // pred_check
          %p267 = pneg %p134
        $region50: #{tpu_custom_call.1} parent=35 // pred_check_branch
          %269 = sbr.rel (%p267) target = $region52
        $region51: #{tpu_custom_call.1} parent=35 // pred_region
          %270 = dma.done [#allocation9], 16
        $region52: #{tpu_custom_call.1} parent=35 // pred_fallthru
          _
        %s271 = sand.u32 %s43, 1
        %s272 = scalar_lea.sflag [#allocation3], %s271
        %s273 = sand.u32 %s43, 1
        %s274 = smul.addr %s273, 256
        %s275 = scalar_lea.vmem [#allocation2], %s274
        %p276 = pneg %p56
        %p277 = pneg %p53
        %p278 = pneg %p82
        %p279 = pneg %p79
        %p280 = pneg %p108
        %p281 = pneg %p105
        %p282 = pneg %p134
        %p283 = pneg %p131
        %p284 = pneg %p162
        %p285 = pneg %p159
        %s286 = sand.u32 %s149, 1
        %s287 = scalar_lea.sflag [#allocation4], %s286
        %s288 = sand.u32 %s149, 1
        %s289 = smul.addr %s288, 128
        %s290 = scalar_lea.vmem [#allocation10], %s289
        %v292 = vld [vmem:[%s254] sm:$0xff]
        %v293 = vld [vmem:[%s254 + $0x8] sm:$0xff]
        %v294 = vld [vmem:[%s254 + $0x10] sm:$0xff]
        %v295 = vld [vmem:[%s254 + $0x18] sm:$0xff]
        %v296 = vld [vmem:[%s254 + $0x20] sm:$0xff]
        %v297 = vld [vmem:[%s254 + $0x28] sm:$0xff]
        %v298 = vld [vmem:[%s254 + $0x30] sm:$0xff]
        %v299 = vld [vmem:[%s254 + $0x38] sm:$0xff]
        %v300 = vld [vmem:[%s254 + $0x40] sm:$0xff]
        %v301 = vld [vmem:[%s254 + $0x48] sm:$0xff]
        %v302 = vld [vmem:[%s254 + $0x50] sm:$0xff]
        %v303 = vld [vmem:[%s254 + $0x58] sm:$0xff]
        %v304 = vld [vmem:[%s254 + $0x60] sm:$0xff]
        %v305 = vld [vmem:[%s254 + $0x68] sm:$0xff]
        %v306 = vld [vmem:[%s254 + $0x70] sm:$0xff]
        %v307 = vld [vmem:[%s254 + $0x78] sm:$0xff]
        %v308 = vld [vmem:[%s254 + $0x80] sm:$0xff]
        %v309 = vld [vmem:[%s254 + $0x88] sm:$0xff]
        %v310 = vld [vmem:[%s254 + $0x90] sm:$0xff]
        %v311 = vld [vmem:[%s254 + $0x98] sm:$0xff]
        %v312 = vld [vmem:[%s254 + $0xa0] sm:$0xff]
        %v313 = vld [vmem:[%s254 + $0xa8] sm:$0xff]
        %v314 = vld [vmem:[%s254 + $0xb0] sm:$0xff]
        %v315 = vld [vmem:[%s254 + $0xb8] sm:$0xff]
        %v316 = vld [vmem:[%s254 + $0xc0] sm:$0xff]
        %v317 = vld [vmem:[%s254 + $0xc8] sm:$0xff]
        %v318 = vld [vmem:[%s254 + $0xd0] sm:$0xff]
        %v319 = vld [vmem:[%s254 + $0xd8] sm:$0xff]
        %v320 = vld [vmem:[%s254 + $0xe0] sm:$0xff]
        %v321 = vld [vmem:[%s254 + $0xe8] sm:$0xff]
        %v322 = vld [vmem:[%s254 + $0xf0] sm:$0xff]
        %v323 = vld [vmem:[%s254 + $0xf8] sm:$0xff]
        %v324 = vpack.c.bf16 %v293, %v292
        %v325 = vpack.c.bf16 %v295, %v294
        %v326 = vpack.c.bf16 %v297, %v296
        %v327 = vpack.c.bf16 %v299, %v298
        %v328 = vpack.c.bf16 %v301, %v300
        %v329 = vpack.c.bf16 %v303, %v302
        %v330 = vpack.c.bf16 %v305, %v304
        %v331 = vpack.c.bf16 %v307, %v306
        %v332 = vpack.c.bf16 %v309, %v308
        %v333 = vpack.c.bf16 %v311, %v310
        %v334 = vpack.c.bf16 %v313, %v312
        %v335 = vpack.c.bf16 %v315, %v314
        %v336 = vpack.c.bf16 %v317, %v316
        %v337 = vpack.c.bf16 %v319, %v318
        %v338 = vpack.c.bf16 %v321, %v320
        %v339 = vpack.c.bf16 %v323, %v322
        %v341 = vshrl.u32 0, 16
        %v343 = vrot.slane %v341, 7
        %v344 = vshll.u32 0, 16
        %v346 = vor.u32 %v343, %v344
        %v348 = vshrl.u32 %v324, 16
        %v350 = vrot.slane %v348, 7
        %v351 = vshll.u32 %v324, 16
        %v353 = vor.u32 %v350, %v351
        %v355 = vshrl.u32 %v325, 16
        %v357 = vrot.slane %v355, 7
        %v358 = vshll.u32 %v325, 16
        %v360 = vor.u32 %v357, %v358
        %v362 = vshrl.u32 %v326, 16
        %v364 = vrot.slane %v362, 7
        %v365 = vshll.u32 %v326, 16
        %v367 = vor.u32 %v364, %v365
        %v369 = vshrl.u32 %v327, 16
        %v371 = vrot.slane %v369, 7
        %v372 = vshll.u32 %v327, 16
        %v374 = vor.u32 %v371, %v372
        %v376 = vshrl.u32 %v328, 16
        %v378 = vrot.slane %v376, 7
        %v379 = vshll.u32 %v328, 16
        %v381 = vor.u32 %v378, %v379
        %v383 = vshrl.u32 %v329, 16
        %v385 = vrot.slane %v383, 7
        %v386 = vshll.u32 %v329, 16
        %v388 = vor.u32 %v385, %v386
        %v390 = vshrl.u32 %v330, 16
        %v392 = vrot.slane %v390, 7
        %v393 = vshll.u32 %v330, 16
        %v395 = vor.u32 %v392, %v393
        %v397 = vshrl.u32 %v331, 16
        %v399 = vrot.slane %v397, 7
        %v400 = vshll.u32 %v331, 16
        %v402 = vor.u32 %v399, %v400
        %v404 = vshrl.u32 %v332, 16
        %v406 = vrot.slane %v404, 7
        %v407 = vshll.u32 %v332, 16
        %v409 = vor.u32 %v406, %v407
        %v411 = vshrl.u32 %v333, 16
        %v413 = vrot.slane %v411, 7
        %v414 = vshll.u32 %v333, 16
        %v416 = vor.u32 %v413, %v414
        %v418 = vshrl.u32 %v334, 16
        %v420 = vrot.slane %v418, 7
        %v421 = vshll.u32 %v334, 16
        %v423 = vor.u32 %v420, %v421
        %v425 = vshrl.u32 %v335, 16
        %v427 = vrot.slane %v425, 7
        %v428 = vshll.u32 %v335, 16
        %v430 = vor.u32 %v427, %v428
        %v432 = vshrl.u32 %v336, 16
        %v434 = vrot.slane %v432, 7
        %v435 = vshll.u32 %v336, 16
        %v437 = vor.u32 %v434, %v435
        %v439 = vshrl.u32 %v337, 16
        %v441 = vrot.slane %v439, 7
        %v442 = vshll.u32 %v337, 16
        %v444 = vor.u32 %v441, %v442
        %v446 = vshrl.u32 %v338, 16
        %v448 = vrot.slane %v446, 7
        %v449 = vshll.u32 %v338, 16
        %v451 = vor.u32 %v448, %v449
        %v453 = vshrl.u32 %v339, 16
        %v455 = vrot.slane %v453, 7
        %v456 = vshll.u32 %v339, 16
        %v458 = vor.u32 %v455, %v456
        %vm493 = vcmask 1040384
        %vm494 = vsmask.f32 256
        %vm495 = vmand %vm493, %vm494
        %v496 = vsel %vm495, 0, %v346
        %v497 = vsel %vm495, 0, %v353
        %v498 = vsel %vm495, 0, %v360
        %v499 = vsel %vm495, 0, %v367
        %v500 = vsel %vm495, 0, %v374
        %v501 = vsel %vm495, 0, %v381
        %v502 = vsel %vm495, 0, %v388
        %v503 = vsel %vm495, 0, %v395
        %v504 = vsel %vm495, 0, %v402
        %v505 = vsel %vm495, 0, %v409
        %v506 = vsel %vm495, 0, %v416
        %v507 = vsel %vm495, 0, %v423
        %v508 = vsel %vm495, 0, %v430
        %v509 = vsel %vm495, 0, %v437
        %v510 = vsel %vm495, 0, %v444
        %v511 = vsel %vm495, 0, %v451
        %v512 = vsel %vm495, 0, %v458
        %v513 = vsel %vm495, %v343, 0
        %v514 = vsel %vm495, %v350, 0
        %v515 = vsel %vm495, %v357, 0
        %v516 = vsel %vm495, %v364, 0
        %v517 = vsel %vm495, %v371, 0
        %v518 = vsel %vm495, %v378, 0
        %v519 = vsel %vm495, %v385, 0
        %v520 = vsel %vm495, %v392, 0
        %v521 = vsel %vm495, %v399, 0
        %v522 = vsel %vm495, %v406, 0
        %v523 = vsel %vm495, %v413, 0
        %v524 = vsel %vm495, %v420, 0
        %v525 = vsel %vm495, %v427, 0
        %v526 = vsel %vm495, %v434, 0
        %v527 = vsel %vm495, %v441, 0
        %v528 = vsel %vm495, %v448, 0
        %v529 = vsel %vm495, %v455, 0
        %vm530 = vsmask.f32 7424
        %v532 = vshrl.u32 %v496, 16
        %v534 = vshll.u32 %v496, 16
        %v536 = vrot.slane %v534, 1
        %v537 = vor.u32 %v532, %v536
        %v539 = vshll.u32 %v513, 16
        %v541 = vrot.slane %v539, 1
        %v542 = vsel %vm530, %v537, %v541
        %v544 = vshrl.u32 %v497, 16
        %v546 = vshll.u32 %v497, 16
        %v548 = vrot.slane %v546, 1
        %v549 = vor.u32 %v544, %v548
        %v551 = vshll.u32 %v514, 16
        %v553 = vrot.slane %v551, 1
        %v554 = vsel %vm530, %v549, %v553
        %v556 = vshrl.u32 %v498, 16
        %v558 = vshll.u32 %v498, 16
        %v560 = vrot.slane %v558, 1
        %v561 = vor.u32 %v556, %v560
        %v563 = vshll.u32 %v515, 16
        %v565 = vrot.slane %v563, 1
        %v566 = vsel %vm530, %v561, %v565
        %v568 = vshrl.u32 %v499, 16
        %v570 = vshll.u32 %v499, 16
        %v572 = vrot.slane %v570, 1
        %v573 = vor.u32 %v568, %v572
        %v575 = vshll.u32 %v516, 16
        %v577 = vrot.slane %v575, 1
        %v578 = vsel %vm530, %v573, %v577
        %v580 = vshrl.u32 %v500, 16
        %v582 = vshll.u32 %v500, 16
        %v584 = vrot.slane %v582, 1
        %v585 = vor.u32 %v580, %v584
        %v587 = vshll.u32 %v517, 16
        %v589 = vrot.slane %v587, 1
        %v590 = vsel %vm530, %v585, %v589
        %v592 = vshrl.u32 %v501, 16
        %v594 = vshll.u32 %v501, 16
        %v596 = vrot.slane %v594, 1
        %v597 = vor.u32 %v592, %v596
        %v599 = vshll.u32 %v518, 16
        %v601 = vrot.slane %v599, 1
        %v602 = vsel %vm530, %v597, %v601
        %v604 = vshrl.u32 %v502, 16
        %v606 = vshll.u32 %v502, 16
        %v608 = vrot.slane %v606, 1
        %v609 = vor.u32 %v604, %v608
        %v611 = vshll.u32 %v519, 16
        %v613 = vrot.slane %v611, 1
        %v614 = vsel %vm530, %v609, %v613
        %v616 = vshrl.u32 %v503, 16
        %v618 = vshll.u32 %v503, 16
        %v620 = vrot.slane %v618, 1
        %v621 = vor.u32 %v616, %v620
        %v623 = vshll.u32 %v520, 16
        %v625 = vrot.slane %v623, 1
        %v626 = vsel %vm530, %v621, %v625
        %v628 = vshrl.u32 %v504, 16
        %v630 = vshll.u32 %v504, 16
        %v632 = vrot.slane %v630, 1
        %v633 = vor.u32 %v628, %v632
        %v635 = vshll.u32 %v521, 16
        %v637 = vrot.slane %v635, 1
        %v638 = vsel %vm530, %v633, %v637
        %v640 = vshrl.u32 %v505, 16
        %v642 = vshll.u32 %v505, 16
        %v644 = vrot.slane %v642, 1
        %v645 = vor.u32 %v640, %v644
        %v647 = vshll.u32 %v522, 16
        %v649 = vrot.slane %v647, 1
        %v650 = vsel %vm530, %v645, %v649
        %v652 = vshrl.u32 %v506, 16
        %v654 = vshll.u32 %v506, 16
        %v656 = vrot.slane %v654, 1
        %v657 = vor.u32 %v652, %v656
        %v659 = vshll.u32 %v523, 16
        %v661 = vrot.slane %v659, 1
        %v662 = vsel %vm530, %v657, %v661
        %v664 = vshrl.u32 %v507, 16
        %v666 = vshll.u32 %v507, 16
        %v668 = vrot.slane %v666, 1
        %v669 = vor.u32 %v664, %v668
        %v671 = vshll.u32 %v524, 16
        %v673 = vrot.slane %v671, 1
        %v674 = vsel %vm530, %v669, %v673
        %v676 = vshrl.u32 %v508, 16
        %v678 = vshll.u32 %v508, 16
        %v680 = vrot.slane %v678, 1
        %v681 = vor.u32 %v676, %v680
        %v683 = vshll.u32 %v525, 16
        %v685 = vrot.slane %v683, 1
        %v686 = vsel %vm530, %v681, %v685
        %v688 = vshrl.u32 %v509, 16
        %v690 = vshll.u32 %v509, 16
        %v692 = vrot.slane %v690, 1
        %v693 = vor.u32 %v688, %v692
        %v695 = vshll.u32 %v526, 16
        %v697 = vrot.slane %v695, 1
        %v698 = vsel %vm530, %v693, %v697
        %v700 = vshrl.u32 %v510, 16
        %v702 = vshll.u32 %v510, 16
        %v704 = vrot.slane %v702, 1
        %v705 = vor.u32 %v700, %v704
        %v707 = vshll.u32 %v527, 16
        %v709 = vrot.slane %v707, 1
        %v710 = vsel %vm530, %v705, %v709
        %v712 = vshrl.u32 %v511, 16
        %v714 = vshll.u32 %v511, 16
        %v716 = vrot.slane %v714, 1
        %v717 = vor.u32 %v712, %v716
        %v719 = vshll.u32 %v528, 16
        %v721 = vrot.slane %v719, 1
        %v722 = vsel %vm530, %v717, %v721
        %723 = vrot.lane.b32.xlu0 %v542, 32
        %v724 = vpop.permute.xlu0 %723
        %725 = vrot.lane.b32.xlu0 %v554, 32
        %v726 = vpop.permute.xlu0 %725
        %727 = vrot.lane.b32.xlu0 %v566, 32
        %v728 = vpop.permute.xlu0 %727
        %729 = vrot.lane.b32.xlu0 %v578, 32
        %v730 = vpop.permute.xlu0 %729
        %731 = vrot.lane.b32.xlu0 %v590, 32
        %v732 = vpop.permute.xlu0 %731
        %733 = vrot.lane.b32.xlu0 %v602, 32
        %v734 = vpop.permute.xlu0 %733
        %735 = vrot.lane.b32.xlu0 %v614, 32
        %v736 = vpop.permute.xlu0 %735
        %737 = vrot.lane.b32.xlu0 %v626, 32
        %v738 = vpop.permute.xlu0 %737
        %739 = vrot.lane.b32.xlu0 %v638, 32
        %v740 = vpop.permute.xlu0 %739
        %741 = vrot.lane.b32.xlu0 %v650, 32
        %v742 = vpop.permute.xlu0 %741
        %743 = vrot.lane.b32.xlu0 %v662, 32
        %v744 = vpop.permute.xlu0 %743
        %745 = vrot.lane.b32.xlu0 %v674, 32
        %v746 = vpop.permute.xlu0 %745
        %747 = vrot.lane.b32.xlu0 %v686, 32
        %v748 = vpop.permute.xlu0 %747
        %749 = vrot.lane.b32.xlu0 %v698, 32
        %v750 = vpop.permute.xlu0 %749
        %751 = vrot.lane.b32.xlu0 %v710, 32
        %v752 = vpop.permute.xlu0 %751
        %753 = vrot.lane.b32.xlu0 %v722, 32
        %v754 = vpop.permute.xlu0 %753
        %vm787 = vcmask 1046528
        %v788 = vrot.slane %v496, 1
        %v789 = vrot.slane %v513, 1
        %v790 = vsel %vm787, %v788, %v789
        %v791 = vrot.slane %v497, 1
        %v792 = vrot.slane %v514, 1
        %v793 = vsel %vm787, %v791, %v792
        %v794 = vrot.slane %v498, 1
        %v795 = vrot.slane %v515, 1
        %v796 = vsel %vm787, %v794, %v795
        %v797 = vrot.slane %v499, 1
        %v798 = vrot.slane %v516, 1
        %v799 = vsel %vm787, %v797, %v798
        %v800 = vrot.slane %v500, 1
        %v801 = vrot.slane %v517, 1
        %v802 = vsel %vm787, %v800, %v801
        %v803 = vrot.slane %v501, 1
        %v804 = vrot.slane %v518, 1
        %v805 = vsel %vm787, %v803, %v804
        %v806 = vrot.slane %v502, 1
        %v807 = vrot.slane %v519, 1
        %v808 = vsel %vm787, %v806, %v807
        %v809 = vrot.slane %v503, 1
        %v810 = vrot.slane %v520, 1
        %v811 = vsel %vm787, %v809, %v810
        %v812 = vrot.slane %v504, 1
        %v813 = vrot.slane %v521, 1
        %v814 = vsel %vm787, %v812, %v813
        %v815 = vrot.slane %v505, 1
        %v816 = vrot.slane %v522, 1
        %v817 = vsel %vm787, %v815, %v816
        %v818 = vrot.slane %v506, 1
        %v819 = vrot.slane %v523, 1
        %v820 = vsel %vm787, %v818, %v819
        %v821 = vrot.slane %v507, 1
        %v822 = vrot.slane %v524, 1
        %v823 = vsel %vm787, %v821, %v822
        %v824 = vrot.slane %v508, 1
        %v825 = vrot.slane %v525, 1
        %v826 = vsel %vm787, %v824, %v825
        %v827 = vrot.slane %v509, 1
        %v828 = vrot.slane %v526, 1
        %v829 = vsel %vm787, %v827, %v828
        %v830 = vrot.slane %v510, 1
        %v831 = vrot.slane %v527, 1
        %v832 = vsel %vm787, %v830, %v831
        %v833 = vrot.slane %v511, 1
        %v834 = vrot.slane %v528, 1
        %v835 = vsel %vm787, %v833, %v834
        %836 = vrot.lane.b32.xlu0 %v790, 64
        %v837 = vpop.permute.xlu0 %836
        %838 = vrot.lane.b32.xlu0 %v793, 64
        %v839 = vpop.permute.xlu0 %838
        %840 = vrot.lane.b32.xlu0 %v796, 64
        %v841 = vpop.permute.xlu0 %840
        %842 = vrot.lane.b32.xlu0 %v799, 64
        %v843 = vpop.permute.xlu0 %842
        %844 = vrot.lane.b32.xlu0 %v802, 64
        %v845 = vpop.permute.xlu0 %844
        %846 = vrot.lane.b32.xlu0 %v805, 64
        %v847 = vpop.permute.xlu0 %846
        %848 = vrot.lane.b32.xlu0 %v808, 64
        %v849 = vpop.permute.xlu0 %848
        %850 = vrot.lane.b32.xlu0 %v811, 64
        %v851 = vpop.permute.xlu0 %850
        %852 = vrot.lane.b32.xlu0 %v814, 64
        %v853 = vpop.permute.xlu0 %852
        %854 = vrot.lane.b32.xlu0 %v817, 64
        %v855 = vpop.permute.xlu0 %854
        %856 = vrot.lane.b32.xlu0 %v820, 64
        %v857 = vpop.permute.xlu0 %856
        %858 = vrot.lane.b32.xlu0 %v823, 64
        %v859 = vpop.permute.xlu0 %858
        %860 = vrot.lane.b32.xlu0 %v826, 64
        %v861 = vpop.permute.xlu0 %860
        %862 = vrot.lane.b32.xlu0 %v829, 64
        %v863 = vpop.permute.xlu0 %862
        %864 = vrot.lane.b32.xlu0 %v832, 64
        %v865 = vpop.permute.xlu0 %864
        %866 = vrot.lane.b32.xlu0 %v835, 64
        %v867 = vpop.permute.xlu0 %866
        %869 = vrot.lane.b32.xlu0 %v497, 96
        %v870 = vpop.permute.xlu0 %869
        %871 = vrot.lane.b32.xlu0 %v498, 96
        %v872 = vpop.permute.xlu0 %871
        %873 = vrot.lane.b32.xlu0 %v499, 96
        %v874 = vpop.permute.xlu0 %873
        %875 = vrot.lane.b32.xlu0 %v500, 96
        %v876 = vpop.permute.xlu0 %875
        %877 = vrot.lane.b32.xlu0 %v501, 96
        %v878 = vpop.permute.xlu0 %877
        %879 = vrot.lane.b32.xlu0 %v502, 96
        %v880 = vpop.permute.xlu0 %879
        %881 = vrot.lane.b32.xlu0 %v503, 96
        %v882 = vpop.permute.xlu0 %881
        %883 = vrot.lane.b32.xlu0 %v504, 96
        %v884 = vpop.permute.xlu0 %883
        %885 = vrot.lane.b32.xlu0 %v505, 96
        %v886 = vpop.permute.xlu0 %885
        %887 = vrot.lane.b32.xlu0 %v506, 96
        %v888 = vpop.permute.xlu0 %887
        %889 = vrot.lane.b32.xlu0 %v507, 96
        %v890 = vpop.permute.xlu0 %889
        %891 = vrot.lane.b32.xlu0 %v508, 96
        %v892 = vpop.permute.xlu0 %891
        %893 = vrot.lane.b32.xlu0 %v509, 96
        %v894 = vpop.permute.xlu0 %893
        %895 = vrot.lane.b32.xlu0 %v510, 96
        %v896 = vpop.permute.xlu0 %895
        %897 = vrot.lane.b32.xlu0 %v511, 96
        %v898 = vpop.permute.xlu0 %897
        %899 = vrot.lane.b32.xlu0 %v512, 96
        %v900 = vpop.permute.xlu0 %899
        %v902 = vshrl.u32 %v512, 16
        %v904 = vshll.u32 %v512, 16
        %v906 = vrot.slane %v904, 1
        %v907 = vor.u32 %v902, %v906
        %v909 = vshll.u32 %v529, 16
        %v911 = vrot.slane %v909, 1
        %v912 = vsel %vm530, %v907, %v911
        %v914 = vrot.slane %v512, 1
        %v915 = vrot.slane %v529, 1
        %v916 = vsel %vm787, %v914, %v915
        %917 = vrot.lane.b32.xlu0 %v793, 32
        %v918 = vpop.permute.xlu0 %917
        %919 = vrot.lane.b32.xlu0 %v796, 32
        %v920 = vpop.permute.xlu0 %919
        %921 = vrot.lane.b32.xlu0 %v799, 32
        %v922 = vpop.permute.xlu0 %921
        %923 = vrot.lane.b32.xlu0 %v802, 32
        %v924 = vpop.permute.xlu0 %923
        %925 = vrot.lane.b32.xlu0 %v805, 32
        %v926 = vpop.permute.xlu0 %925
        %927 = vrot.lane.b32.xlu0 %v808, 32
        %v928 = vpop.permute.xlu0 %927
        %929 = vrot.lane.b32.xlu0 %v811, 32
        %v930 = vpop.permute.xlu0 %929
        %931 = vrot.lane.b32.xlu0 %v814, 32
        %v932 = vpop.permute.xlu0 %931
        %933 = vrot.lane.b32.xlu0 %v817, 32
        %v934 = vpop.permute.xlu0 %933
        %935 = vrot.lane.b32.xlu0 %v820, 32
        %v936 = vpop.permute.xlu0 %935
        %937 = vrot.lane.b32.xlu0 %v823, 32
        %v938 = vpop.permute.xlu0 %937
        %939 = vrot.lane.b32.xlu0 %v826, 32
        %v940 = vpop.permute.xlu0 %939
        %941 = vrot.lane.b32.xlu0 %v829, 32
        %v942 = vpop.permute.xlu0 %941
        %943 = vrot.lane.b32.xlu0 %v832, 32
        %v944 = vpop.permute.xlu0 %943
        %945 = vrot.lane.b32.xlu0 %v835, 32
        %v946 = vpop.permute.xlu0 %945
        %947 = vrot.lane.b32.xlu0 %v916, 32
        %v948 = vpop.permute.xlu0 %947
        %949 = vrot.lane.b32.xlu0 %v498, 64
        %v950 = vpop.permute.xlu0 %949
        %951 = vrot.lane.b32.xlu0 %v499, 64
        %v952 = vpop.permute.xlu0 %951
        %953 = vrot.lane.b32.xlu0 %v500, 64
        %v954 = vpop.permute.xlu0 %953
        %955 = vrot.lane.b32.xlu0 %v501, 64
        %v956 = vpop.permute.xlu0 %955
        %957 = vrot.lane.b32.xlu0 %v502, 64
        %v958 = vpop.permute.xlu0 %957
        %959 = vrot.lane.b32.xlu0 %v503, 64
        %v960 = vpop.permute.xlu0 %959
        %961 = vrot.lane.b32.xlu0 %v504, 64
        %v962 = vpop.permute.xlu0 %961
        %963 = vrot.lane.b32.xlu0 %v505, 64
        %v964 = vpop.permute.xlu0 %963
        %965 = vrot.lane.b32.xlu0 %v506, 64
        %v966 = vpop.permute.xlu0 %965
        %967 = vrot.lane.b32.xlu0 %v507, 64
        %v968 = vpop.permute.xlu0 %967
        %969 = vrot.lane.b32.xlu0 %v508, 64
        %v970 = vpop.permute.xlu0 %969
        %971 = vrot.lane.b32.xlu0 %v509, 64
        %v972 = vpop.permute.xlu0 %971
        %973 = vrot.lane.b32.xlu0 %v510, 64
        %v974 = vpop.permute.xlu0 %973
        %975 = vrot.lane.b32.xlu0 %v511, 64
        %v976 = vpop.permute.xlu0 %975
        %977 = vrot.lane.b32.xlu0 %v512, 64
        %v978 = vpop.permute.xlu0 %977
        %979 = vrot.lane.b32.xlu0 %v496, 64
        %v980 = vpop.permute.xlu0 %979
        %981 = vrot.lane.b32.xlu0 %v566, 96
        %v982 = vpop.permute.xlu0 %981
        %983 = vrot.lane.b32.xlu0 %v578, 96
        %v984 = vpop.permute.xlu0 %983
        %985 = vrot.lane.b32.xlu0 %v590, 96
        %v986 = vpop.permute.xlu0 %985
        %987 = vrot.lane.b32.xlu0 %v602, 96
        %v988 = vpop.permute.xlu0 %987
        %989 = vrot.lane.b32.xlu0 %v614, 96
        %v990 = vpop.permute.xlu0 %989
        %991 = vrot.lane.b32.xlu0 %v626, 96
        %v992 = vpop.permute.xlu0 %991
        %993 = vrot.lane.b32.xlu0 %v638, 96
        %v994 = vpop.permute.xlu0 %993
        %995 = vrot.lane.b32.xlu0 %v650, 96
        %v996 = vpop.permute.xlu0 %995
        %997 = vrot.lane.b32.xlu0 %v662, 96
        %v998 = vpop.permute.xlu0 %997
        %999 = vrot.lane.b32.xlu0 %v674, 96
        %v1000 = vpop.permute.xlu0 %999
        %1001 = vrot.lane.b32.xlu0 %v686, 96
        %v1002 = vpop.permute.xlu0 %1001
        %1003 = vrot.lane.b32.xlu0 %v698, 96
        %v1004 = vpop.permute.xlu0 %1003
        %1005 = vrot.lane.b32.xlu0 %v710, 96
        %v1006 = vpop.permute.xlu0 %1005
        %1007 = vrot.lane.b32.xlu0 %v722, 96
        %v1008 = vpop.permute.xlu0 %1007
        %1009 = vrot.lane.b32.xlu0 %v912, 96
        %v1010 = vpop.permute.xlu0 %1009
        %1011 = vrot.lane.b32.xlu0 %v542, 96
        %v1012 = vpop.permute.xlu0 %1011
        %vm1013 = vcmask 261120
        %v1015 = vsel %vm1013, %v496, %v724
        %v1017 = vsel %vm1013, %v497, %v726
        %v1019 = vsel %vm1013, %v498, %v728
        %v1021 = vsel %vm1013, %v499, %v730
        %v1023 = vsel %vm1013, %v500, %v732
        %v1025 = vsel %vm1013, %v501, %v734
        %v1027 = vsel %vm1013, %v502, %v736
        %v1029 = vsel %vm1013, %v503, %v738
        %v1031 = vsel %vm1013, %v504, %v740
        %v1033 = vsel %vm1013, %v505, %v742
        %v1035 = vsel %vm1013, %v506, %v744
        %v1037 = vsel %vm1013, %v507, %v746
        %v1039 = vsel %vm1013, %v508, %v748
        %v1041 = vsel %vm1013, %v509, %v750
        %v1043 = vsel %vm1013, %v510, %v752
        %v1045 = vsel %vm1013, %v511, %v754
        %vm1046 = vcmask 523264
        %v1048 = vsel %vm1046, %v1015, %v837
        %v1050 = vsel %vm1046, %v1017, %v839
        %v1052 = vsel %vm1046, %v1019, %v841
        %v1054 = vsel %vm1046, %v1021, %v843
        %v1056 = vsel %vm1046, %v1023, %v845
        %v1058 = vsel %vm1046, %v1025, %v847
        %v1060 = vsel %vm1046, %v1027, %v849
        %v1062 = vsel %vm1046, %v1029, %v851
        %v1064 = vsel %vm1046, %v1031, %v853
        %v1066 = vsel %vm1046, %v1033, %v855
        %v1068 = vsel %vm1046, %v1035, %v857
        %v1070 = vsel %vm1046, %v1037, %v859
        %v1072 = vsel %vm1046, %v1039, %v861
        %v1074 = vsel %vm1046, %v1041, %v863
        %v1076 = vsel %vm1046, %v1043, %v865
        %v1078 = vsel %vm1046, %v1045, %v867
        %vm1079 = vcmask 785408
        %v1081 = vsel %vm1079, %v1048, %v870
        %v1084 = vsel %vm1079, %v1050, %v872
        %v1087 = vsel %vm1079, %v1052, %v874
        %v1090 = vsel %vm1079, %v1054, %v876
        %v1093 = vsel %vm1079, %v1056, %v878
        %v1096 = vsel %vm1079, %v1058, %v880
        %v1099 = vsel %vm1079, %v1060, %v882
        %v1102 = vsel %vm1079, %v1062, %v884
        %v1105 = vsel %vm1079, %v1064, %v886
        %v1108 = vsel %vm1079, %v1066, %v888
        %v1111 = vsel %vm1079, %v1068, %v890
        %v1114 = vsel %vm1079, %v1070, %v892
        %v1117 = vsel %vm1079, %v1072, %v894
        %v1120 = vsel %vm1079, %v1074, %v896
        %v1123 = vsel %vm1079, %v1076, %v898
        %v1126 = vsel %vm1079, %v1078, %v900
        %v1130 = vsel %vm1013, %v554, %v918
        %v1133 = vsel %vm1013, %v566, %v920
        %v1136 = vsel %vm1013, %v578, %v922
        %v1139 = vsel %vm1013, %v590, %v924
        %v1142 = vsel %vm1013, %v602, %v926
        %v1145 = vsel %vm1013, %v614, %v928
        %v1148 = vsel %vm1013, %v626, %v930
        %v1151 = vsel %vm1013, %v638, %v932
        %v1154 = vsel %vm1013, %v650, %v934
        %v1157 = vsel %vm1013, %v662, %v936
        %v1160 = vsel %vm1013, %v674, %v938
        %v1163 = vsel %vm1013, %v686, %v940
        %v1166 = vsel %vm1013, %v698, %v942
        %v1169 = vsel %vm1013, %v710, %v944
        %v1172 = vsel %vm1013, %v722, %v946
        %v1175 = vsel %vm1013, %v912, %v948
        %v1177 = vsel %vm1046, %v1130, %v950
        %v1179 = vsel %vm1046, %v1133, %v952
        %v1181 = vsel %vm1046, %v1136, %v954
        %v1183 = vsel %vm1046, %v1139, %v956
        %v1185 = vsel %vm1046, %v1142, %v958
        %v1187 = vsel %vm1046, %v1145, %v960
        %v1189 = vsel %vm1046, %v1148, %v962
        %v1191 = vsel %vm1046, %v1151, %v964
        %v1193 = vsel %vm1046, %v1154, %v966
        %v1195 = vsel %vm1046, %v1157, %v968
        %v1197 = vsel %vm1046, %v1160, %v970
        %v1199 = vsel %vm1046, %v1163, %v972
        %v1201 = vsel %vm1046, %v1166, %v974
        %v1203 = vsel %vm1046, %v1169, %v976
        %v1205 = vsel %vm1046, %v1172, %v978
        %v1207 = vsel %vm1046, %v1175, %v980
        %v1209 = vsel %vm1079, %v1177, %v982
        %v1212 = vsel %vm1079, %v1179, %v984
        %v1215 = vsel %vm1079, %v1181, %v986
        %v1218 = vsel %vm1079, %v1183, %v988
        %v1221 = vsel %vm1079, %v1185, %v990
        %v1224 = vsel %vm1079, %v1187, %v992
        %v1227 = vsel %vm1079, %v1189, %v994
        %v1230 = vsel %vm1079, %v1191, %v996
        %v1233 = vsel %vm1079, %v1193, %v998
        %v1236 = vsel %vm1079, %v1195, %v1000
        %v1239 = vsel %vm1079, %v1197, %v1002
        %v1242 = vsel %vm1079, %v1199, %v1004
        %v1245 = vsel %vm1079, %v1201, %v1006
        %v1248 = vsel %vm1079, %v1203, %v1008
        %v1251 = vsel %vm1079, %v1205, %v1010
        %v1254 = vsel %vm1079, %v1207, %v1012
        %v1256 = vld [vmem:[#allocation5] sm:$0xf]
        %v1257 = vld [vmem:[#allocation5 + $0x4] sm:$0xf]
        %v1258 = vld [vmem:[#allocation5 + $0x8] sm:$0xf]
        %v1259 = vld [vmem:[#allocation5 + $0xc] sm:$0xf]
        %v1260 = vld [vmem:[#allocation5 + $0x10] sm:$0xf]
        %v1261 = vld [vmem:[#allocation5 + $0x14] sm:$0xf]
        %v1262 = vld [vmem:[#allocation5 + $0x18] sm:$0xf]
        %v1263 = vld [vmem:[#allocation5 + $0x1c] sm:$0xf]
        %v1264 = vld [vmem:[#allocation5 + $0x20] sm:$0xf]
        %v1265 = vld [vmem:[#allocation5 + $0x24] sm:$0xf]
        %v1266 = vld [vmem:[#allocation5 + $0x28] sm:$0xf]
        %v1267 = vld [vmem:[#allocation5 + $0x2c] sm:$0xf]
        %v1268 = vld [vmem:[#allocation5 + $0x30] sm:$0xf]
        %v1269 = vld [vmem:[#allocation5 + $0x34] sm:$0xf]
        %v1270 = vld [vmem:[#allocation5 + $0x38] sm:$0xf]
        %v1271 = vld [vmem:[#allocation5 + $0x3c] sm:$0xf]
        %v1272 = vld [vmem:[#allocation5 + $0x40] sm:$0xf]
        %v1273 = vld [vmem:[#allocation5 + $0x44] sm:$0xf]
        %v1274 = vld [vmem:[#allocation5 + $0x48] sm:$0xf]
        %v1275 = vld [vmem:[#allocation5 + $0x4c] sm:$0xf]
        %v1276 = vld [vmem:[#allocation5 + $0x50] sm:$0xf]
        %v1277 = vld [vmem:[#allocation5 + $0x54] sm:$0xf]
        %v1278 = vld [vmem:[#allocation5 + $0x58] sm:$0xf]
        %v1279 = vld [vmem:[#allocation5 + $0x5c] sm:$0xf]
        %v1280 = vld [vmem:[#allocation5 + $0x60] sm:$0xf]
        %v1281 = vld [vmem:[#allocation5 + $0x64] sm:$0xf]
        %v1282 = vld [vmem:[#allocation5 + $0x68] sm:$0xf]
        %v1283 = vld [vmem:[#allocation5 + $0x6c] sm:$0xf]
        %v1284 = vld [vmem:[#allocation5 + $0x70] sm:$0xf]
        %v1285 = vld [vmem:[#allocation5 + $0x74] sm:$0xf]
        %v1286 = vld [vmem:[#allocation5 + $0x78] sm:$0xf]
        %v1287 = vld [vmem:[#allocation5 + $0x7c] sm:$0xf]
        %v1288 = vld [vmem:[#allocation5 + $0x80] sm:$0xf]
        %v1289 = vld [vmem:[#allocation5 + $0x84] sm:$0xf]
        %v1290 = vld [vmem:[#allocation5 + $0x88] sm:$0xf]
        %v1291 = vld [vmem:[#allocation5 + $0x8c] sm:$0xf]
        %v1328 = vunpack.c.l.b16 %v1256
        %v1329 = vunpack.c.l.b16 %v1257
        %v1330 = vunpack.c.l.b16 %v1258
        %v1331 = vunpack.c.l.b16 %v1259
        %v1332 = vunpack.c.l.b16 %v1260
        %v1333 = vunpack.c.l.b16 %v1261
        %v1334 = vunpack.c.l.b16 %v1262
        %v1335 = vunpack.c.l.b16 %v1263
        %v1336 = vunpack.c.l.b16 %v1264
        %v1337 = vunpack.c.l.b16 %v1265
        %v1338 = vunpack.c.l.b16 %v1266
        %v1339 = vunpack.c.l.b16 %v1267
        %v1340 = vunpack.c.l.b16 %v1268
        %v1341 = vunpack.c.l.b16 %v1269
        %v1342 = vunpack.c.l.b16 %v1270
        %v1343 = vunpack.c.l.b16 %v1271
        %v1344 = vunpack.c.l.b16 %v1272
        %v1345 = vunpack.c.l.b16 %v1273
        %v1346 = vunpack.c.l.b16 %v1274
        %v1347 = vunpack.c.l.b16 %v1275
        %v1348 = vunpack.c.l.b16 %v1276
        %v1349 = vunpack.c.l.b16 %v1277
        %v1350 = vunpack.c.l.b16 %v1278
        %v1351 = vunpack.c.l.b16 %v1279
        %v1352 = vunpack.c.l.b16 %v1280
        %v1353 = vunpack.c.l.b16 %v1281
        %v1354 = vunpack.c.l.b16 %v1282
        %v1355 = vunpack.c.l.b16 %v1283
        %v1356 = vunpack.c.l.b16 %v1284
        %v1357 = vunpack.c.l.b16 %v1285
        %v1358 = vunpack.c.l.b16 %v1286
        %v1359 = vunpack.c.l.b16 %v1287
        %v1360 = vunpack.c.l.b16 %v1288
        %v1361 = vunpack.c.l.b16 %v1289
        %v1362 = vunpack.c.l.b16 %v1290
        %v1363 = vunpack.c.l.b16 %v1291
        %v1364 = vpack.c.b16 %v1329, %v1328
        %v1365 = vpack.c.b16 %v1331, %v1330
        %v1366 = vpack.c.b16 %v1333, %v1332
        %v1367 = vpack.c.b16 %v1335, %v1334
        %v1368 = vpack.c.b16 %v1337, %v1336
        %v1369 = vpack.c.b16 %v1339, %v1338
        %v1370 = vpack.c.b16 %v1341, %v1340
        %v1371 = vpack.c.b16 %v1343, %v1342
        %v1372 = vpack.c.b16 %v1345, %v1344
        %v1373 = vpack.c.b16 %v1347, %v1346
        %v1374 = vpack.c.b16 %v1349, %v1348
        %v1375 = vpack.c.b16 %v1351, %v1350
        %v1376 = vpack.c.b16 %v1353, %v1352
        %v1377 = vpack.c.b16 %v1355, %v1354
        %v1378 = vpack.c.b16 %v1357, %v1356
        %v1379 = vpack.c.b16 %v1359, %v1358
        %v1380 = vpack.c.b16 %v1361, %v1360
        %v1381 = vpack.c.b16 %v1363, %v1362
        %v1401 = vsel %vm1013, %v796, 0
        %v1404 = vsel %vm1013, %v799, 0
        %v1407 = vsel %vm1013, %v802, 0
        %v1410 = vsel %vm1013, %v805, 0
        %v1413 = vsel %vm1013, %v808, 0
        %v1416 = vsel %vm1013, %v811, 0
        %v1419 = vsel %vm1013, %v814, 0
        %v1422 = vsel %vm1013, %v817, 0
        %v1425 = vsel %vm1013, %v820, 0
        %v1428 = vsel %vm1013, %v823, 0
        %v1431 = vsel %vm1013, %v826, 0
        %v1434 = vsel %vm1013, %v829, 0
        %v1437 = vsel %vm1013, %v832, 0
        %v1440 = vsel %vm1013, %v835, 0
        %v1443 = vsel %vm1013, %v916, 0
        %v1446 = vsel %vm1013, %v790, 0
        %1448 = vmatprep.subr.bf16.mxu0 0
        %1449 = vmatpush1.bf16.msra.mxu0 %v1364
        %1450 = vmatprep.subr.bf16.mxu0 0
        %1451 = vmatpush1.bf16.msra.mxu0 %v1365
        %1452 = vmatprep.subr.bf16.mxu0 0
        %1453 = vmatpush1.bf16.msra.mxu0 %v1366
        %1454 = vmatprep.subr.bf16.mxu0 0
        %1455 = vmatpush1.bf16.msra.mxu0 %v1367
        %1456 = vmatprep.subr.bf16.mxu0 0
        %1457 = vmatpush1.bf16.msra.mxu0 %v1368
        %1458 = vmatprep.subr.bf16.mxu0 0
        %1459 = vmatpush1.bf16.msra.mxu0 %v1369
        %1460 = vmatprep.subr.bf16.mxu0 0
        %1461 = vmatpush1.bf16.msra.mxu0 %v1370
        %1462 = vmatprep.subr.bf16.mxu0 0
        %1463 = vmatpush1.bf16.msra.mxu0 %v1371
        %1464 = vmatprep.subr.bf16.mxu0 0
        %1465 = vmatpush1.bf16.msra.mxu0 %v1372
        %1466 = vmatprep.subr.bf16.mxu0 0
        %1467 = vmatpush1.bf16.msra.mxu0 %v1373
        %1468 = vmatprep.subr.bf16.mxu0 0
        %1469 = vmatpush1.bf16.msra.mxu0 %v1374
        %1470 = vmatprep.subr.bf16.mxu0 0
        %1471 = vmatpush1.bf16.msra.mxu0 %v1375
        %1472 = vmatprep.subr.bf16.mxu0 0
        %1473 = vmatpush1.bf16.msra.mxu0 %v1376
        %1474 = vmatprep.subr.bf16.mxu0 0
        %1475 = vmatpush1.bf16.msra.mxu0 %v1377
        %1476 = vmatprep.subr.bf16.mxu0 0
        %1477 = vmatpush1.bf16.msra.mxu0 %v1378
        %1478 = vmatprep.subr.bf16.mxu0 0
        %1479 = vmatpush1.bf16.msra.mxu0 %v1379
        %1480 = vmatprep.mubr.bf16.mxu0 %v1209
        %1481 = vmatmul.mubr.bf16.gmra.mrb[0].mxu0 %v1081
        %v1482 = vpop.f32.mrb[0].mxu0
        %v1483 = vadd.f32 0.0, %v1482
        %v1484 = vpop.f32.mrb[0].mxu0
        %v1485 = vpop.f32.mrb[0].mxu0
        %v1486 = vadd.f32 0.0, %v1485
        %v1487 = vpop.f32.mrb[0].mxu0
        %1488 = vmatprep.mubr.bf16.mxu0 %v1212
        %1489 = vmatmul.mubr.bf16.gmra.mrb[0].mxu0 %v1084
        %v1490 = vpop.f32.mrb[0].mxu0
        %v1491 = vadd.f32 0.0, %v1490
        %v1492 = vpop.f32.mrb[0].mxu0
        %v1493 = vpop.f32.mrb[0].mxu0
        %v1494 = vadd.f32 0.0, %v1493
        %v1495 = vpop.f32.mrb[0].mxu0
        %1496 = vmatprep.mubr.bf16.mxu0 %v1215
        %1497 = vmatmul.mubr.bf16.gmra.mrb[0].mxu0 %v1087
        %v1498 = vpop.f32.mrb[0].mxu0
        %v1499 = vadd.f32 0.0, %v1498
        %v1500 = vpop.f32.mrb[0].mxu0
        %v1501 = vpop.f32.mrb[0].mxu0
        %v1502 = vadd.f32 0.0, %v1501
        %v1503 = vpop.f32.mrb[0].mxu0
        %1504 = vmatprep.mubr.bf16.mxu0 %v1218
        %1505 = vmatmul.mubr.bf16.gmra.mrb[0].mxu0 %v1090
        %v1506 = vpop.f32.mrb[0].mxu0
        %v1507 = vadd.f32 0.0, %v1506
        %v1508 = vpop.f32.mrb[0].mxu0
        %v1509 = vpop.f32.mrb[0].mxu0
        %v1510 = vadd.f32 0.0, %v1509
        %v1511 = vpop.f32.mrb[0].mxu0
        %1512 = vmatprep.mubr.bf16.mxu0 %v1221
        %1513 = vmatmul.mubr.bf16.gmra.mrb[0].mxu0 %v1093
        %v1514 = vpop.f32.mrb[0].mxu0
        %v1515 = vadd.f32 0.0, %v1514
        %v1516 = vpop.f32.mrb[0].mxu0
        %v1517 = vpop.f32.mrb[0].mxu0
        %v1518 = vadd.f32 0.0, %v1517
        %v1519 = vpop.f32.mrb[0].mxu0
        %1520 = vmatprep.mubr.bf16.mxu0 %v1224
        %1521 = vmatmul.mubr.bf16.gmra.mrb[0].mxu0 %v1096
        %v1522 = vpop.f32.mrb[0].mxu0
        %v1523 = vadd.f32 0.0, %v1522
        %v1524 = vpop.f32.mrb[0].mxu0
        %v1525 = vpop.f32.mrb[0].mxu0
        %v1526 = vadd.f32 0.0, %v1525
        %v1527 = vpop.f32.mrb[0].mxu0
        %1528 = vmatprep.mubr.bf16.mxu0 %v1227
        %1529 = vmatmul.mubr.bf16.gmra.mrb[0].mxu0 %v1099
        %v1530 = vpop.f32.mrb[0].mxu0
        %v1531 = vadd.f32 0.0, %v1530
        %v1532 = vpop.f32.mrb[0].mxu0
        %v1533 = vpop.f32.mrb[0].mxu0
        %v1534 = vadd.f32 0.0, %v1533
        %v1535 = vpop.f32.mrb[0].mxu0
        %1536 = vmatprep.mubr.bf16.mxu0 %v1230
        %1537 = vmatmul.mubr.bf16.gmra.mrb[0].mxu0 %v1102
        %v1538 = vpop.f32.mrb[0].mxu0
        %v1539 = vadd.f32 0.0, %v1538
        %v1540 = vpop.f32.mrb[0].mxu0
        %v1541 = vpop.f32.mrb[0].mxu0
        %v1542 = vadd.f32 0.0, %v1541
        %v1543 = vpop.f32.mrb[0].mxu0
        %1544 = vmatprep.mubr.bf16.mxu0 %v1233
        %1545 = vmatmul.mubr.bf16.gmra.mrb[0].mxu0 %v1105
        %v1546 = vpop.f32.mrb[0].mxu0
        %v1547 = vadd.f32 0.0, %v1546
        %v1548 = vpop.f32.mrb[0].mxu0
        %v1549 = vpop.f32.mrb[0].mxu0
        %v1550 = vadd.f32 0.0, %v1549
        %v1551 = vpop.f32.mrb[0].mxu0
        %1552 = vmatprep.mubr.bf16.mxu0 %v1236
        %1553 = vmatmul.mubr.bf16.gmra.mrb[0].mxu0 %v1108
        %v1554 = vpop.f32.mrb[0].mxu0
        %v1555 = vadd.f32 0.0, %v1554
        %v1556 = vpop.f32.mrb[0].mxu0
        %v1557 = vpop.f32.mrb[0].mxu0
        %v1558 = vadd.f32 0.0, %v1557
        %v1559 = vpop.f32.mrb[0].mxu0
        %1560 = vmatprep.mubr.bf16.mxu0 %v1239
        %1561 = vmatmul.mubr.bf16.gmra.mrb[0].mxu0 %v1111
        %v1562 = vpop.f32.mrb[0].mxu0
        %v1563 = vadd.f32 0.0, %v1562
        %v1564 = vpop.f32.mrb[0].mxu0
        %v1565 = vpop.f32.mrb[0].mxu0
        %v1566 = vadd.f32 0.0, %v1565
        %v1567 = vpop.f32.mrb[0].mxu0
        %1568 = vmatprep.mubr.bf16.mxu0 %v1242
        %1569 = vmatmul.mubr.bf16.gmra.mrb[0].mxu0 %v1114
        %v1570 = vpop.f32.mrb[0].mxu0
        %v1571 = vadd.f32 0.0, %v1570
        %v1572 = vpop.f32.mrb[0].mxu0
        %v1573 = vpop.f32.mrb[0].mxu0
        %v1574 = vadd.f32 0.0, %v1573
        %v1575 = vpop.f32.mrb[0].mxu0
        %1576 = vmatprep.mubr.bf16.mxu0 %v1245
        %1577 = vmatmul.mubr.bf16.gmra.mrb[0].mxu0 %v1117
        %v1578 = vpop.f32.mrb[0].mxu0
        %v1579 = vadd.f32 0.0, %v1578
        %v1580 = vpop.f32.mrb[0].mxu0
        %v1581 = vpop.f32.mrb[0].mxu0
        %v1582 = vadd.f32 0.0, %v1581
        %v1583 = vpop.f32.mrb[0].mxu0
        %1584 = vmatprep.mubr.bf16.mxu0 %v1248
        %1585 = vmatmul.mubr.bf16.gmra.mrb[0].mxu0 %v1120
        %v1586 = vpop.f32.mrb[0].mxu0
        %v1587 = vadd.f32 0.0, %v1586
        %v1588 = vpop.f32.mrb[0].mxu0
        %v1589 = vpop.f32.mrb[0].mxu0
        %v1590 = vadd.f32 0.0, %v1589
        %v1591 = vpop.f32.mrb[0].mxu0
        %1592 = vmatprep.mubr.bf16.mxu0 %v1251
        %1593 = vmatmul.mubr.bf16.gmra.mrb[0].mxu0 %v1123
        %v1594 = vpop.f32.mrb[0].mxu0
        %v1595 = vadd.f32 0.0, %v1594
        %v1596 = vpop.f32.mrb[0].mxu0
        %v1597 = vpop.f32.mrb[0].mxu0
        %v1598 = vadd.f32 0.0, %v1597
        %v1599 = vpop.f32.mrb[0].mxu0
        %1600 = vmatprep.mubr.bf16.mxu0 %v1254
        %1601 = vmatmul.mubr.bf16.gmra.mrb[0].mxu0 %v1126
        %v1602 = vpop.f32.mrb[0].mxu0
        %v1603 = vadd.f32 0.0, %v1602
        %v1604 = vpop.f32.mrb[0].mxu0
        %v1605 = vpop.f32.mrb[0].mxu0
        %v1606 = vadd.f32 0.0, %v1605
        %v1607 = vpop.f32.mrb[0].mxu0
        %1608 = vdwg.mxu0
        %1609 = vmatprep.subr.bf16.mxu0 0
        %1610 = vmatpush1.bf16.msra.mxu0 %v1380
        %1611 = vmatprep.subr.bf16.mxu0 0
        %1612 = vmatpush1.bf16.msra.mxu0 %v1381
        %1613 = vmatprep.subr.bf16.mxu0 0
        %1614 = vmatpush1.bf16.msra.mxu0 0
        %1615 = vmatprep.subr.bf16.mxu0 0
        %1616 = vmatpush1.bf16.msra.mxu0 0
        %1617 = vmatprep.subr.bf16.mxu0 0
        %1618 = vmatpush1.bf16.msra.mxu0 0
        %1619 = vmatprep.subr.bf16.mxu0 0
        %1620 = vmatpush1.bf16.msra.mxu0 0
        %1621 = vmatprep.subr.bf16.mxu0 0
        %1622 = vmatpush1.bf16.msra.mxu0 0
        %1623 = vmatprep.subr.bf16.mxu0 0
        %1624 = vmatpush1.bf16.msra.mxu0 0
        %1625 = vmatprep.subr.bf16.mxu0 0
        %1626 = vmatpush1.bf16.msra.mxu0 0
        %1627 = vmatprep.subr.bf16.mxu0 0
        %1628 = vmatpush1.bf16.msra.mxu0 0
        %1629 = vmatprep.subr.bf16.mxu0 0
        %1630 = vmatpush1.bf16.msra.mxu0 0
        %1631 = vmatprep.subr.bf16.mxu0 0
        %1632 = vmatpush1.bf16.msra.mxu0 0
        %1633 = vmatprep.subr.bf16.mxu0 0
        %1634 = vmatpush1.bf16.msra.mxu0 0
        %1635 = vmatprep.subr.bf16.mxu0 0
        %1636 = vmatpush1.bf16.msra.mxu0 0
        %1637 = vmatprep.subr.bf16.mxu0 0
        %1638 = vmatpush1.bf16.msra.mxu0 0
        %1639 = vmatprep.subr.bf16.mxu0 0
        %1640 = vmatpush1.bf16.msra.mxu0 0
        %1641 = vmatprep.mubr.bf16.mxu0 0
        %1642 = vmatmul.mubr.bf16.gmra.mrb[0].mxu0 %v1401
        %v1643 = vpop.f32.mrb[0].mxu0
        %v1644 = vadd.f32 %v1483, %v1643
        %v1645 = vpop.f32.mrb[0].mxu0
        %v1646 = vpop.f32.mrb[0].mxu0
        %v1647 = vadd.f32 %v1486, %v1646
        %v1648 = vpop.f32.mrb[0].mxu0
        %1649 = vmatprep.mubr.bf16.mxu0 0
        %1650 = vmatmul.mubr.bf16.gmra.mrb[0].mxu0 %v1404
        %v1651 = vpop.f32.mrb[0].mxu0
        %v1652 = vadd.f32 %v1491, %v1651
        %v1653 = vpop.f32.mrb[0].mxu0
        %v1654 = vpop.f32.mrb[0].mxu0
        %v1655 = vadd.f32 %v1494, %v1654
        %v1656 = vpop.f32.mrb[0].mxu0
        %1657 = vmatprep.mubr.bf16.mxu0 0
        %1658 = vmatmul.mubr.bf16.gmra.mrb[0].mxu0 %v1407
        %v1659 = vpop.f32.mrb[0].mxu0
        %v1660 = vadd.f32 %v1499, %v1659
        %v1661 = vpop.f32.mrb[0].mxu0
        %v1662 = vpop.f32.mrb[0].mxu0
        %v1663 = vadd.f32 %v1502, %v1662
        %v1664 = vpop.f32.mrb[0].mxu0
        %1665 = vmatprep.mubr.bf16.mxu0 0
        %1666 = vmatmul.mubr.bf16.gmra.mrb[0].mxu0 %v1410
        %v1667 = vpop.f32.mrb[0].mxu0
        %v1668 = vadd.f32 %v1507, %v1667
        %v1669 = vpop.f32.mrb[0].mxu0
        %v1670 = vpop.f32.mrb[0].mxu0
        %v1671 = vadd.f32 %v1510, %v1670
        %v1672 = vpop.f32.mrb[0].mxu0
        %1673 = vmatprep.mubr.bf16.mxu0 0
        %1674 = vmatmul.mubr.bf16.gmra.mrb[0].mxu0 %v1413
        %v1675 = vpop.f32.mrb[0].mxu0
        %v1676 = vadd.f32 %v1515, %v1675
        %v1677 = vpop.f32.mrb[0].mxu0
        %v1678 = vpop.f32.mrb[0].mxu0
        %v1679 = vadd.f32 %v1518, %v1678
        %v1680 = vpop.f32.mrb[0].mxu0
        %1681 = vmatprep.mubr.bf16.mxu0 0
        %1682 = vmatmul.mubr.bf16.gmra.mrb[0].mxu0 %v1416
        %v1683 = vpop.f32.mrb[0].mxu0
        %v1684 = vadd.f32 %v1523, %v1683
        %v1685 = vpop.f32.mrb[0].mxu0
        %v1686 = vpop.f32.mrb[0].mxu0
        %v1687 = vadd.f32 %v1526, %v1686
        %v1688 = vpop.f32.mrb[0].mxu0
        %1689 = vmatprep.mubr.bf16.mxu0 0
        %1690 = vmatmul.mubr.bf16.gmra.mrb[0].mxu0 %v1419
        %v1691 = vpop.f32.mrb[0].mxu0
        %v1692 = vadd.f32 %v1531, %v1691
        %v1693 = vpop.f32.mrb[0].mxu0
        %v1694 = vpop.f32.mrb[0].mxu0
        %v1695 = vadd.f32 %v1534, %v1694
        %v1696 = vpop.f32.mrb[0].mxu0
        %1697 = vmatprep.mubr.bf16.mxu0 0
        %1698 = vmatmul.mubr.bf16.gmra.mrb[0].mxu0 %v1422
        %v1699 = vpop.f32.mrb[0].mxu0
        %v1700 = vadd.f32 %v1539, %v1699
        %v1701 = vpop.f32.mrb[0].mxu0
        %v1702 = vpop.f32.mrb[0].mxu0
        %v1703 = vadd.f32 %v1542, %v1702
        %v1704 = vpop.f32.mrb[0].mxu0
        %1705 = vmatprep.mubr.bf16.mxu0 0
        %1706 = vmatmul.mubr.bf16.gmra.mrb[0].mxu0 %v1425
        %v1707 = vpop.f32.mrb[0].mxu0
        %v1708 = vadd.f32 %v1547, %v1707
        %v1709 = vpop.f32.mrb[0].mxu0
        %v1710 = vpop.f32.mrb[0].mxu0
        %v1711 = vadd.f32 %v1550, %v1710
        %v1712 = vpop.f32.mrb[0].mxu0
        %1713 = vmatprep.mubr.bf16.mxu0 0
        %1714 = vmatmul.mubr.bf16.gmra.mrb[0].mxu0 %v1428
        %v1715 = vpop.f32.mrb[0].mxu0
        %v1716 = vadd.f32 %v1555, %v1715
        %v1717 = vpop.f32.mrb[0].mxu0
        %v1718 = vpop.f32.mrb[0].mxu0
        %v1719 = vadd.f32 %v1558, %v1718
        %v1720 = vpop.f32.mrb[0].mxu0
        %1721 = vmatprep.mubr.bf16.mxu0 0
        %1722 = vmatmul.mubr.bf16.gmra.mrb[0].mxu0 %v1431
        %v1723 = vpop.f32.mrb[0].mxu0
        %v1724 = vadd.f32 %v1563, %v1723
        %v1725 = vpop.f32.mrb[0].mxu0
        %v1726 = vpop.f32.mrb[0].mxu0
        %v1727 = vadd.f32 %v1566, %v1726
        %v1728 = vpop.f32.mrb[0].mxu0
        %1729 = vmatprep.mubr.bf16.mxu0 0
        %1730 = vmatmul.mubr.bf16.gmra.mrb[0].mxu0 %v1434
        %v1731 = vpop.f32.mrb[0].mxu0
        %v1732 = vadd.f32 %v1571, %v1731
        %v1733 = vpop.f32.mrb[0].mxu0
        %v1734 = vpop.f32.mrb[0].mxu0
        %v1735 = vadd.f32 %v1574, %v1734
        %v1736 = vpop.f32.mrb[0].mxu0
        %1737 = vmatprep.mubr.bf16.mxu0 0
        %1738 = vmatmul.mubr.bf16.gmra.mrb[0].mxu0 %v1437
        %v1739 = vpop.f32.mrb[0].mxu0
        %v1740 = vadd.f32 %v1579, %v1739
        %v1741 = vpop.f32.mrb[0].mxu0
        %v1742 = vpop.f32.mrb[0].mxu0
        %v1743 = vadd.f32 %v1582, %v1742
        %v1744 = vpop.f32.mrb[0].mxu0
        %1745 = vmatprep.mubr.bf16.mxu0 0
        %1746 = vmatmul.mubr.bf16.gmra.mrb[0].mxu0 %v1440
        %v1747 = vpop.f32.mrb[0].mxu0
        %v1748 = vadd.f32 %v1587, %v1747
        %v1749 = vpop.f32.mrb[0].mxu0
        %v1750 = vpop.f32.mrb[0].mxu0
        %v1751 = vadd.f32 %v1590, %v1750
        %v1752 = vpop.f32.mrb[0].mxu0
        %1753 = vmatprep.mubr.bf16.mxu0 0
        %1754 = vmatmul.mubr.bf16.gmra.mrb[0].mxu0 %v1443
        %v1755 = vpop.f32.mrb[0].mxu0
        %v1756 = vadd.f32 %v1595, %v1755
        %v1757 = vpop.f32.mrb[0].mxu0
        %v1758 = vpop.f32.mrb[0].mxu0
        %v1759 = vadd.f32 %v1598, %v1758
        %v1760 = vpop.f32.mrb[0].mxu0
        %1761 = vmatprep.mubr.bf16.mxu0 0
        %1762 = vmatmul.mubr.bf16.gmra.mrb[0].mxu0 %v1446
        %v1763 = vpop.f32.mrb[0].mxu0
        %v1764 = vadd.f32 %v1603, %v1763
        %v1765 = vpop.f32.mrb[0].mxu0
        %v1766 = vpop.f32.mrb[0].mxu0
        %v1767 = vadd.f32 %v1606, %v1766
        %v1768 = vpop.f32.mrb[0].mxu0
        %1769 = vdwg.mxu0
        %v1770 = vld [vmem:[#allocation7] sm:$0x1]
        %v1772 = vlaneseq
        %v1773 = vshrl.u32 %v1772, 7
        %v1774 = vsub.s32 0, %v1773
        %v1775 = vrot.slane %v1770, %v1774
        %v1777 = vmul.f32 %v1644, %v1775
        %v1778 = vmul.f32 %v1647, %v1775
        %v1779 = vmul.f32 %v1652, %v1775
        %v1780 = vmul.f32 %v1655, %v1775
        %v1781 = vmul.f32 %v1660, %v1775
        %v1782 = vmul.f32 %v1663, %v1775
        %v1783 = vmul.f32 %v1668, %v1775
        %v1784 = vmul.f32 %v1671, %v1775
        %v1785 = vmul.f32 %v1676, %v1775
        %v1786 = vmul.f32 %v1679, %v1775
        %v1787 = vmul.f32 %v1684, %v1775
        %v1788 = vmul.f32 %v1687, %v1775
        %v1789 = vmul.f32 %v1692, %v1775
        %v1790 = vmul.f32 %v1695, %v1775
        %v1791 = vmul.f32 %v1700, %v1775
        %v1792 = vmul.f32 %v1703, %v1775
        %v1793 = vmul.f32 %v1708, %v1775
        %v1794 = vmul.f32 %v1711, %v1775
        %v1795 = vmul.f32 %v1716, %v1775
        %v1796 = vmul.f32 %v1719, %v1775
        %v1797 = vmul.f32 %v1724, %v1775
        %v1798 = vmul.f32 %v1727, %v1775
        %v1799 = vmul.f32 %v1732, %v1775
        %v1800 = vmul.f32 %v1735, %v1775
        %v1801 = vmul.f32 %v1740, %v1775
        %v1802 = vmul.f32 %v1743, %v1775
        %v1803 = vmul.f32 %v1748, %v1775
        %v1804 = vmul.f32 %v1751, %v1775
        %v1805 = vmul.f32 %v1756, %v1775
        %v1806 = vmul.f32 %v1759, %v1775
        %v1807 = vmul.f32 %v1764, %v1775
        %v1808 = vmul.f32 %v1767, %v1775
        %v1809 = vld [vmem:[#allocation8] sm:$0x1]
        %v1811 = vlaneseq
        %v1812 = vshrl.u32 %v1811, 7
        %v1813 = vsub.s32 0, %v1812
        %v1814 = vrot.slane %v1809, %v1813
        %v1816 = vadd.f32 %v1777, %v1814
        %v1817 = vadd.f32 %v1778, %v1814
        %v1818 = vadd.f32 %v1779, %v1814
        %v1819 = vadd.f32 %v1780, %v1814
        %v1820 = vadd.f32 %v1781, %v1814
        %v1821 = vadd.f32 %v1782, %v1814
        %v1822 = vadd.f32 %v1783, %v1814
        %v1823 = vadd.f32 %v1784, %v1814
        %v1824 = vadd.f32 %v1785, %v1814
        %v1825 = vadd.f32 %v1786, %v1814
        %v1826 = vadd.f32 %v1787, %v1814
        %v1827 = vadd.f32 %v1788, %v1814
        %v1828 = vadd.f32 %v1789, %v1814
        %v1829 = vadd.f32 %v1790, %v1814
        %v1830 = vadd.f32 %v1791, %v1814
        %v1831 = vadd.f32 %v1792, %v1814
        %v1832 = vadd.f32 %v1793, %v1814
        %v1833 = vadd.f32 %v1794, %v1814
        %v1834 = vadd.f32 %v1795, %v1814
        %v1835 = vadd.f32 %v1796, %v1814
        %v1836 = vadd.f32 %v1797, %v1814
        %v1837 = vadd.f32 %v1798, %v1814
        %v1838 = vadd.f32 %v1799, %v1814
        %v1839 = vadd.f32 %v1800, %v1814
        %v1840 = vadd.f32 %v1801, %v1814
        %v1841 = vadd.f32 %v1802, %v1814
        %v1842 = vadd.f32 %v1803, %v1814
        %v1843 = vadd.f32 %v1804, %v1814
        %v1844 = vadd.f32 %v1805, %v1814
        %v1845 = vadd.f32 %v1806, %v1814
        %v1846 = vadd.f32 %v1807, %v1814
        %v1847 = vadd.f32 %v1808, %v1814
        %v1848 = vmax.f32 %v1816, 0.0
        %v1849 = vmax.f32 %v1817, 0.0
        %v1850 = vmax.f32 %v1818, 0.0
        %v1851 = vmax.f32 %v1819, 0.0
        %v1852 = vmax.f32 %v1820, 0.0
        %v1853 = vmax.f32 %v1821, 0.0
        %v1854 = vmax.f32 %v1822, 0.0
        %v1855 = vmax.f32 %v1823, 0.0
        %v1856 = vmax.f32 %v1824, 0.0
        %v1857 = vmax.f32 %v1825, 0.0
        %v1858 = vmax.f32 %v1826, 0.0
        %v1859 = vmax.f32 %v1827, 0.0
        %v1860 = vmax.f32 %v1828, 0.0
        %v1861 = vmax.f32 %v1829, 0.0
        %v1862 = vmax.f32 %v1830, 0.0
        %v1863 = vmax.f32 %v1831, 0.0
        %v1864 = vmax.f32 %v1832, 0.0
        %v1865 = vmax.f32 %v1833, 0.0
        %v1866 = vmax.f32 %v1834, 0.0
        %v1867 = vmax.f32 %v1835, 0.0
        %v1868 = vmax.f32 %v1836, 0.0
        %v1869 = vmax.f32 %v1837, 0.0
        %v1870 = vmax.f32 %v1838, 0.0
        %v1871 = vmax.f32 %v1839, 0.0
        %v1872 = vmax.f32 %v1840, 0.0
        %v1873 = vmax.f32 %v1841, 0.0
        %v1874 = vmax.f32 %v1842, 0.0
        %v1875 = vmax.f32 %v1843, 0.0
        %v1876 = vmax.f32 %v1844, 0.0
        %v1877 = vmax.f32 %v1845, 0.0
        %v1878 = vmax.f32 %v1846, 0.0
        %v1879 = vmax.f32 %v1847, 0.0
        %v1880 = vpack.c.bf16 %v1849, %v1848
        %v1881 = vpack.c.bf16 %v1851, %v1850
        %v1882 = vpack.c.bf16 %v1853, %v1852
        %v1883 = vpack.c.bf16 %v1855, %v1854
        %v1884 = vpack.c.bf16 %v1857, %v1856
        %v1885 = vpack.c.bf16 %v1859, %v1858
        %v1886 = vpack.c.bf16 %v1861, %v1860
        %v1887 = vpack.c.bf16 %v1863, %v1862
        %v1888 = vpack.c.bf16 %v1865, %v1864
        %v1889 = vpack.c.bf16 %v1867, %v1866
        %v1890 = vpack.c.bf16 %v1869, %v1868
        %v1891 = vpack.c.bf16 %v1871, %v1870
        %v1892 = vpack.c.bf16 %v1873, %v1872
        %v1893 = vpack.c.bf16 %v1875, %v1874
        %v1894 = vpack.c.bf16 %v1877, %v1876
        %v1895 = vpack.c.bf16 %v1879, %v1878
        %v1912 = vunpack.c.l.b16 %v1880
        %v1913 = vunpack.c.h.b16 %v1880
        %v1914 = vunpack.c.l.b16 %v1881
        %v1915 = vunpack.c.h.b16 %v1881
        %v1916 = vunpack.c.l.b16 %v1882
        %v1917 = vunpack.c.h.b16 %v1882
        %v1918 = vunpack.c.l.b16 %v1883
        %v1919 = vunpack.c.h.b16 %v1883
        %v1920 = vunpack.c.l.b16 %v1884
        %v1921 = vunpack.c.h.b16 %v1884
        %v1922 = vunpack.c.l.b16 %v1885
        %v1923 = vunpack.c.h.b16 %v1885
        %v1924 = vunpack.c.l.b16 %v1886
        %v1925 = vunpack.c.h.b16 %v1886
        %v1926 = vunpack.c.l.b16 %v1887
        %v1927 = vunpack.c.h.b16 %v1887
        %v1928 = vunpack.c.l.b16 %v1888
        %v1929 = vunpack.c.h.b16 %v1888
        %v1930 = vunpack.c.l.b16 %v1889
        %v1931 = vunpack.c.h.b16 %v1889
        %v1932 = vunpack.c.l.b16 %v1890
        %v1933 = vunpack.c.h.b16 %v1890
        %v1934 = vunpack.c.l.b16 %v1891
        %v1935 = vunpack.c.h.b16 %v1891
        %v1936 = vunpack.c.l.b16 %v1892
        %v1937 = vunpack.c.h.b16 %v1892
        %v1938 = vunpack.c.l.b16 %v1893
        %v1939 = vunpack.c.h.b16 %v1893
        %v1940 = vunpack.c.l.b16 %v1894
        %v1941 = vunpack.c.h.b16 %v1894
        %v1942 = vunpack.c.l.b16 %v1895
        %v1943 = vunpack.c.h.b16 %v1895
        %v1944 = vpack.c.b16 %v1912, %v1912
        %v1945 = vpack.c.b16 %v1913, %v1913
        %v1946 = vpack.c.b16 %v1914, %v1914
        %v1947 = vpack.c.b16 %v1915, %v1915
        %v1948 = vpack.c.b16 %v1916, %v1916
        %v1949 = vpack.c.b16 %v1917, %v1917
        %v1950 = vpack.c.b16 %v1918, %v1918
        %v1951 = vpack.c.b16 %v1919, %v1919
        %v1952 = vpack.c.b16 %v1920, %v1920
        %v1953 = vpack.c.b16 %v1921, %v1921
        %v1954 = vpack.c.b16 %v1922, %v1922
        %v1955 = vpack.c.b16 %v1923, %v1923
        %v1956 = vpack.c.b16 %v1924, %v1924
        %v1957 = vpack.c.b16 %v1925, %v1925
        %v1958 = vpack.c.b16 %v1926, %v1926
        %v1959 = vpack.c.b16 %v1927, %v1927
        %v1960 = vpack.c.b16 %v1928, %v1928
        %v1961 = vpack.c.b16 %v1929, %v1929
        %v1962 = vpack.c.b16 %v1930, %v1930
        %v1963 = vpack.c.b16 %v1931, %v1931
        %v1964 = vpack.c.b16 %v1932, %v1932
        %v1965 = vpack.c.b16 %v1933, %v1933
        %v1966 = vpack.c.b16 %v1934, %v1934
        %v1967 = vpack.c.b16 %v1935, %v1935
        %v1968 = vpack.c.b16 %v1936, %v1936
        %v1969 = vpack.c.b16 %v1937, %v1937
        %v1970 = vpack.c.b16 %v1938, %v1938
        %v1971 = vpack.c.b16 %v1939, %v1939
        %v1972 = vpack.c.b16 %v1940, %v1940
        %v1973 = vpack.c.b16 %v1941, %v1941
        %v1974 = vpack.c.b16 %v1942, %v1942
        %v1975 = vpack.c.b16 %v1943, %v1943
        %vm2008 = vcmask 257024
        %2009 = vst.msk [vmem:[%s290] sm:$0xf] %vm2008, %v1944
        %2010 = vst.msk [vmem:[%s290 + $0x4] sm:$0xf] %vm2008, %v1945
        %2011 = vst.msk [vmem:[%s290 + $0x8] sm:$0xf] %vm2008, %v1946
        %2012 = vst.msk [vmem:[%s290 + $0xc] sm:$0xf] %vm2008, %v1947
        %2013 = vst.msk [vmem:[%s290 + $0x10] sm:$0xf] %vm2008, %v1948
        %2014 = vst.msk [vmem:[%s290 + $0x14] sm:$0xf] %vm2008, %v1949
        %2015 = vst.msk [vmem:[%s290 + $0x18] sm:$0xf] %vm2008, %v1950
        %2016 = vst.msk [vmem:[%s290 + $0x1c] sm:$0xf] %vm2008, %v1951
        %2017 = vst.msk [vmem:[%s290 + $0x20] sm:$0xf] %vm2008, %v1952
        %2018 = vst.msk [vmem:[%s290 + $0x24] sm:$0xf] %vm2008, %v1953
        %2019 = vst.msk [vmem:[%s290 + $0x28] sm:$0xf] %vm2008, %v1954
        %2020 = vst.msk [vmem:[%s290 + $0x2c] sm:$0xf] %vm2008, %v1955
        %2021 = vst.msk [vmem:[%s290 + $0x30] sm:$0xf] %vm2008, %v1956
        %2022 = vst.msk [vmem:[%s290 + $0x34] sm:$0xf] %vm2008, %v1957
        %2023 = vst.msk [vmem:[%s290 + $0x38] sm:$0xf] %vm2008, %v1958
        %2024 = vst.msk [vmem:[%s290 + $0x3c] sm:$0xf] %vm2008, %v1959
        %2025 = vst.msk [vmem:[%s290 + $0x40] sm:$0xf] %vm2008, %v1960
        %2026 = vst.msk [vmem:[%s290 + $0x44] sm:$0xf] %vm2008, %v1961
        %2027 = vst.msk [vmem:[%s290 + $0x48] sm:$0xf] %vm2008, %v1962
        %2028 = vst.msk [vmem:[%s290 + $0x4c] sm:$0xf] %vm2008, %v1963
        %2029 = vst.msk [vmem:[%s290 + $0x50] sm:$0xf] %vm2008, %v1964
        %2030 = vst.msk [vmem:[%s290 + $0x54] sm:$0xf] %vm2008, %v1965
        %2031 = vst.msk [vmem:[%s290 + $0x58] sm:$0xf] %vm2008, %v1966
        %2032 = vst.msk [vmem:[%s290 + $0x5c] sm:$0xf] %vm2008, %v1967
        %2033 = vst.msk [vmem:[%s290 + $0x60] sm:$0xf] %vm2008, %v1968
        %2034 = vst.msk [vmem:[%s290 + $0x64] sm:$0xf] %vm2008, %v1969
        %2035 = vst.msk [vmem:[%s290 + $0x68] sm:$0xf] %vm2008, %v1970
        %2036 = vst.msk [vmem:[%s290 + $0x6c] sm:$0xf] %vm2008, %v1971
        %2037 = vst.msk [vmem:[%s290 + $0x70] sm:$0xf] %vm2008, %v1972
        %2038 = vst.msk [vmem:[%s290 + $0x74] sm:$0xf] %vm2008, %v1973
        %2039 = vst.msk [vmem:[%s290 + $0x78] sm:$0xf] %vm2008, %v1974
        %2040 = vst.msk [vmem:[%s290 + $0x7c] sm:$0xf] %vm2008, %v1975
        %s2041 = sand.u32 %s149, 1
        %s2042 = scalar_lea.sflag [#allocation4], %s2041
        %s2043 = sand.u32 %s149, 1
        %s2044 = smul.addr %s2043, 128
        %s2045 = scalar_lea.vmem [#allocation10], %s2044
        // Predicated region
        $region53: #{tpu_custom_call.1} parent=35 // pred_check
          %p2046 = pneg %p159
        $region54: #{tpu_custom_call.1} parent=35 // pred_check_branch
          %2048 = sbr.rel (%p2046) target = $region56
        $region55: #{tpu_custom_call.1} parent=35 // pred_region
          %s2050 = ssub.s32 2048, 2048
          %2051 = vsyncadd %s2042, %s2050
          %s2052 = smul.addr %s27, 32
          %s2053 = sadd.s32 %s28, %s2052
          %s2054 = smul.addr %s2053, 64
          %s2055 = scalar_lea.hbm %s4, %s2054
          %s2056 = sshll.u32 %s2045, 4
          %s2057 = int_to_ptr.vmem [resolvable:$true] %s2056
          %2062 = dma.vmem_to_hbm [thread:$0]  %s2057, 2048, %s2055, %s2042, 64, 64, 4
        $region56: #{tpu_custom_call.1} parent=35 // pred_fallthru
          _
      $region36: #{tpu_custom_call.1} parent=5 // pred_fallthru
        _
      %p2063 = scmp.le.s32.totalorder 2, %s18
      // Predicated region
      $region57: #{tpu_custom_call.1} parent=5 // pred_check
        %p2064 = pneg %p2063
      $region58: #{tpu_custom_call.1} parent=5 // pred_check_branch
        %2066 = sbr.rel (%p2064) target = $region60
      $region59: #{tpu_custom_call.1} parent=5 // pred_region
        %s2067 = ssub.s32 %s18, 2
        // Predicated region
        $region61: #{tpu_custom_call.1} parent=59 // pred_check
          %p2068 = pneg %p165
        $region62: #{tpu_custom_call.1} parent=59 // pred_check_branch
          %2070 = sbr.rel (%p2068) target = $region64
        $region63: #{tpu_custom_call.1} parent=59 // pred_region
          %s2071 = sand.u32 %s150, 1
          %s2072 = scalar_lea.sflag [#allocation4], %s2071
          %s2073 = sand.u32 %s150, 1
          %s2074 = smul.addr %s2073, 128
          %s2075 = scalar_lea.vmem [#allocation10], %s2074
          %2076 = dma.done %s2072, 2048
        $region64: #{tpu_custom_call.1} parent=59 // pred_fallthru
          _
      $region60: #{tpu_custom_call.1} parent=5 // pred_fallthru
        _
    $region6: #{tpu_custom_call.1} parent=1 // loop_footer
      %s22 = sadd.s32 1, %s18
    $region7: #{tpu_custom_call.1} parent=1 // loop_footer_branch
      %17 = sbr.rel target = $region3
    $region8: #{tpu_custom_call.1} parent=1 // loop_exit
      _
    %2077 = vsyncpa [#allocation3], 1
    %s2078 = scalar_lea.sflag [#allocation3], 1
    %2079 = vsyncpa %s2078, 1
    %2080 = vsyncpa [#allocation6], 1
    %2081 = vsyncpa [#allocation9], 1
    %2082 = vsyncpa [#allocation4], 1
    %s2083 = scalar_lea.sflag [#allocation4], 1
    %2084 = vsyncpa %s2083, 1

</llo_original>
